<compile_context>
chip_gen: v6e
topology: v6e:2x2x1
jax: 0.10.0
libtpu: 0.0.40
codegen_flags: <defaults>
</compile_context>

<pallas_src>
import functools

import jax
import jax.numpy as jnp
from jax.experimental import pallas as pl
from jax.experimental.pallas import tpu as pltpu  # noqa: F401  (TPU backend)

NUM_LAYERS = 2  # kernel is specialized to the 2-layer GRU instantiation


def recovery_kernel(h_ref,
                    wih0_ref, bih0_ref,
                    whh_ref, bhh_ref,
                    wih1_ref, bih1_ref,
                    wfc_ref, bfc_ref,
                    out_ref,
                    *, seq_len, batch, feat_dim):
    """Single-invocation 2-layer GRU + fc + sigmoid.

    h_ref    : (T*B, L)  bf16, time-major flattened input (row t*B + b == H[b, t])
    wih0_ref : (L, 3F)   bf16, gate order [r, z, n]
    whh_ref  : (2F, 6F)  bf16, blockdiag(whh0^T, whh1^T)
    wih1_ref : (F, 3F)   bf16
    wfc_ref  : (F, F)    bf16
    b*_ref   : f32 biases, shapes (1, 3F) / (1, 6F) / (1, F)
    out_ref  : (T*B, F)  output (H.dtype)
    """
    T, B, F = seq_len, batch, feat_dim

    # ---- Prologue (time-independent): layer-0 input projection for ALL time
    # steps as one well-shaped matmul, kept as a register value (no scratch).
    gi0_all = (jnp.dot(h_ref[...], wih0_ref[...],
                       preferred_element_type=jnp.float32)
               + bih0_ref[...])                       # (T*B, 3F) f32

    # Hoist weight loads and bias broadcasts out of the recurrence.
    whh = whh_ref[...]                                 # (2F, 6F) bf16
    wih1 = wih1_ref[...]                               # (F, 3F)  bf16
    bhh = jnp.broadcast_to(bhh_ref[...], (B, 6 * F))   # f32
    bih1 = jnp.broadcast_to(bih1_ref[...], (B, 3 * F)) # f32

    def gru_update(gi, gh, h_prev):
        # PyTorch gate order [r, z, n]; b_hn stays inside r * (...).
        r = jax.nn.sigmoid(gi[:, :F] + gh[:, :F])
        z = jax.nn.sigmoid(gi[:, F:2 * F] + gh[:, F:2 * F])
        n = jnp.tanh(gi[:, 2 * F:] + r * gh[:, 2 * F:])
        return n + z * (h_prev - n)          # == (1 - z) * n + z * h_prev

    h0 = jnp.zeros((B, F), jnp.float32)
    h1 = jnp.zeros((B, F), jnp.float32)
    h1_steps = []

    # Time recurrence: fully-unrolled static loop (T static & small); hidden
    # state and per-step outputs stay in registers.
    for t in range(T):
        # One fused MXU push for BOTH hidden-path projections of this step.
        hh = jnp.concatenate([h0, h1], axis=1).astype(jnp.bfloat16)   # (B, 2F)
        gh = jnp.dot(hh, whh, preferred_element_type=jnp.float32) + bhh
        gh0 = gh[:, :3 * F]
        gh1 = gh[:, 3 * F:]

        # Layer 0: hoisted input projection + hidden path.
        gi0 = gi0_all[t * B:(t + 1) * B, :]
        h0 = gru_update(gi0, gh0, h0)

        # Layer 1: fused-gate input projection of the fresh h0.
        gi1 = (jnp.dot(h0.astype(jnp.bfloat16), wih1,
                       preferred_element_type=jnp.float32) + bih1)
        h1 = gru_update(gi1, gh1, h1)
        h1_steps.append(h1)

    # ---- Epilogue (time-independent): fc + sigmoid over all T*B rows as one
    # matmul and ONE contiguous store of out_ref.
    ys = jnp.concatenate(h1_steps, axis=0)             # (T*B, F) f32
    y = (jnp.dot(ys.astype(jnp.bfloat16), wfc_ref[...],
                 preferred_element_type=jnp.float32)
         + bfc_ref[...])
    out_ref[...] = jax.nn.sigmoid(y).astype(out_ref.dtype)


def pack_params(params, feat_dim):
    """One-time weight packing: transpose, gate-fuse, blockdiag, bf16-cast."""
    F = feat_dim
    mm = jnp.bfloat16
    zero = jnp.zeros((F, 3 * F), jnp.float32)
    whh_blk = jnp.concatenate(
        [jnp.concatenate([params["w_hh0"].T, zero], axis=1),
         jnp.concatenate([zero, params["w_hh1"].T], axis=1)], axis=0)
    return {
        "wih0": params["w_ih0"].T.astype(mm),                       # (L, 3F)
        "bih0": params["b_ih0"].reshape(1, 3 * F),
        "whh": whh_blk.astype(mm),                                  # (2F, 6F)
        "bhh": jnp.concatenate([params["b_hh0"],
                                params["b_hh1"]]).reshape(1, 6 * F),
        "wih1": params["w_ih1"].T.astype(mm),                       # (F, 3F)
        "bih1": params["b_ih1"].reshape(1, 3 * F),
        "wfc": params["w_fc"].T.astype(mm),                         # (F, F)
        "bfc": params["b_fc"].reshape(1, F),
    }


@functools.partial(jax.jit, static_argnames=("feat_dim",))
def recovery_forward(H, packed, *, feat_dim):
    """H: (batch, seq_len, latent_dim) f32 -> (batch, seq_len, feat_dim)."""
    B, T, L = H.shape
    F = feat_dim
    TB = T * B

    # Time-major flatten at the boundary: row t*B + b of Hf is H[b, t].
    Hf = jnp.transpose(H, (1, 0, 2)).reshape(TB, L).astype(jnp.bfloat16)

    kernel = functools.partial(recovery_kernel, seq_len=T, batch=B, feat_dim=F)
    out_flat = pl.pallas_call(
        kernel,
        out_shape=jax.ShapeDtypeStruct((TB, F), H.dtype),
    )(Hf,
      packed["wih0"], packed["bih0"],
      packed["whh"], packed["bhh"],
      packed["wih1"], packed["bih1"],
      packed["wfc"], packed["bfc"])

    # Back to PyTorch batch-first layout.
    return jnp.transpose(out_flat.reshape(T, B, F), (1, 0, 2))


def recovery_reference(H, params, feat_dim):
    """Pure-JAX f32 reference (PyTorch GRU semantics)."""
    B, T, L = H.shape
    F = feat_dim

    def cell(x, h, w_ih, w_hh, b_ih, b_hh):
        gi = x @ w_ih.T + b_ih
        gh = h @ w_hh.T + b_hh
        r = jax.nn.sigmoid(gi[:, :F] + gh[:, :F])
        z = jax.nn.sigmoid(gi[:, F:2 * F] + gh[:, F:2 * F])
        n = jnp.tanh(gi[:, 2 * F:] + r * gh[:, 2 * F:])
        return (1.0 - z) * n + z * h

    h0 = jnp.zeros((B, F), jnp.float32)
    h1 = jnp.zeros((B, F), jnp.float32)
    outs = []
    for t in range(T):
        x = H[:, t, :]
        h0 = cell(x, h0, params["w_ih0"], params["w_hh0"],
                  params["b_ih0"], params["b_hh0"])
        h1 = cell(h0, h1, params["w_ih1"], params["w_hh1"],
                  params["b_ih1"], params["b_hh1"])
        outs.append(jax.nn.sigmoid(h1 @ params["w_fc"].T + params["b_fc"]))
    return jnp.stack(outs, axis=1)


def init_params(key, feat_dim, latent_dim):
    """Deterministic parameter init mirroring nn.GRU / nn.Linear shapes."""
    F, L = feat_dim, latent_dim
    bound = 1.0 / jnp.sqrt(F)
    ks = jax.random.split(key, 10)
    u = lambda k, shape: jax.random.uniform(k, shape, jnp.float32, -bound, bound)
    return {
        # GRU layer 0: input_size = latent_dim
        "w_ih0": u(ks[0], (3 * F, L)), "w_hh0": u(ks[1], (3 * F, F)),
        "b_ih0": u(ks[2], (3 * F,)),   "b_hh0": u(ks[3], (3 * F,)),
        # GRU layer 1: input_size = feat_dim
        "w_ih1": u(ks[4], (3 * F, F)), "w_hh1": u(ks[5], (3 * F, F)),
        "b_ih1": u(ks[6], (3 * F,)),   "b_hh1": u(ks[7], (3 * F,)),
        # fc: Linear(feat_dim, feat_dim)
        "w_fc": u(ks[8], (F, F)),      "b_fc": u(ks[9], (F,)),
    }


if __name__ == "__main__":
    batch, seq_len, latent_dim, feat_dim = 2, 8, 32, 16

    key = jax.random.PRNGKey(0)
    k_h, k_p = jax.random.split(key)
    H = jax.random.normal(k_h, (batch, seq_len, latent_dim), jnp.float32)
    params = init_params(k_p, feat_dim, latent_dim)

    # Pre-pack weights once, outside the per-call (jit'ed) path.
    packed = pack_params(params, feat_dim)

    out = recovery_forward(H, packed, feat_dim=feat_dim)
    out = jax.block_until_ready(out)

    ref = recovery_reference(H, params, feat_dim)
    assert out.shape == (batch, seq_len, feat_dim)
    # bf16 matmul operands (f32 accumulate / f32 gate math) -> loosened tol.
    max_err = float(jnp.max(jnp.abs(out - ref)))
    assert max_err < 2e-2, f"max abs error {max_err}"

    print("KERNEL_OK")
</pallas_src>

<mosaic_0001>
module attributes {stable_mosaic.version = 11 : i64} {
  func.func @recovery_kernel(%arg0: memref<16x32xbf16, #tpu.memory_space<vmem>>, %arg1: memref<32x48xbf16, #tpu.memory_space<vmem>>, %arg2: memref<1x48xf32, #tpu.memory_space<vmem>>, %arg3: memref<32x96xbf16, #tpu.memory_space<vmem>>, %arg4: memref<1x96xf32, #tpu.memory_space<vmem>>, %arg5: memref<16x48xbf16, #tpu.memory_space<vmem>>, %arg6: memref<1x48xf32, #tpu.memory_space<vmem>>, %arg7: memref<16x16xbf16, #tpu.memory_space<vmem>>, %arg8: memref<1x16xf32, #tpu.memory_space<vmem>>, %arg9: memref<16x16xf32, #tpu.memory_space<vmem>>) attributes {dimension_semantics = [], scalar_prefetch = 0 : i64, scratch_operands = 0 : i64, tpu.core_type = #tpu.core_type<tc>} {
    %c0 = arith.constant 0 : index
    %c0_0 = arith.constant 0 : index
    %0 = vector.load %arg0[%c0, %c0_0] : memref<16x32xbf16, #tpu.memory_space<vmem>>, vector<16x32xbf16>
    %c0_1 = arith.constant 0 : index
    %c0_2 = arith.constant 0 : index
    %1 = vector.load %arg1[%c0_1, %c0_2] : memref<32x48xbf16, #tpu.memory_space<vmem>>, vector<32x48xbf16>
    %cst = arith.constant dense<0.000000e+00> : vector<16x48xf32>
    %2 = tpu.matmul %0, %1, %cst {dimension_numbers = #tpu.dot_dimension_numbers<[1], [0], [0], [1], [0, 0, 1, 1], [], []>} : vector<16x32xbf16>, vector<32x48xbf16>, vector<16x48xf32> -> vector<16x48xf32>
    %c0_3 = arith.constant 0 : index
    %c0_4 = arith.constant 0 : index
    %3 = vector.load %arg2[%c0_3, %c0_4] : memref<1x48xf32, #tpu.memory_space<vmem>>, vector<1x48xf32>
    %4 = vector.broadcast %3 : vector<1x48xf32> to vector<16x48xf32>
    %5 = arith.addf %2, %4 : vector<16x48xf32>
    %c0_5 = arith.constant 0 : index
    %c0_6 = arith.constant 0 : index
    %6 = vector.load %arg3[%c0_5, %c0_6] : memref<32x96xbf16, #tpu.memory_space<vmem>>, vector<32x96xbf16>
    %c0_7 = arith.constant 0 : index
    %c0_8 = arith.constant 0 : index
    %7 = vector.load %arg5[%c0_7, %c0_8] : memref<16x48xbf16, #tpu.memory_space<vmem>>, vector<16x48xbf16>
    %c0_9 = arith.constant 0 : index
    %c0_10 = arith.constant 0 : index
    %8 = vector.load %arg4[%c0_9, %c0_10] : memref<1x96xf32, #tpu.memory_space<vmem>>, vector<1x96xf32>
    %9 = vector.shape_cast %8 : vector<1x96xf32> to vector<1x96xf32>
    %10 = vector.broadcast %9 : vector<1x96xf32> to vector<2x96xf32>
    %c0_11 = arith.constant 0 : index
    %c0_12 = arith.constant 0 : index
    %11 = vector.load %arg6[%c0_11, %c0_12] : memref<1x48xf32, #tpu.memory_space<vmem>>, vector<1x48xf32>
    %12 = vector.shape_cast %11 : vector<1x48xf32> to vector<1x48xf32>
    %13 = vector.broadcast %12 : vector<1x48xf32> to vector<2x48xf32>
    %cst_13 = arith.constant 0.000000e+00 : f32
    %14 = vector.broadcast %cst_13 : f32 to vector<2x16xf32>
    %cst_14 = arith.constant 0.000000e+00 : f32
    %15 = vector.broadcast %cst_14 : f32 to vector<2x16xf32>
    %16 = tpu.concatenate %14, %15 in 1 : vector<2x16xf32>, vector<2x16xf32> -> vector<2x32xf32>
    %17 = arith.truncf %16 : vector<2x32xf32> to vector<2x32xbf16>
    %cst_15 = arith.constant dense<0.000000e+00> : vector<2x96xf32>
    %18 = tpu.matmul %17, %6, %cst_15 {dimension_numbers = #tpu.dot_dimension_numbers<[1], [0], [0], [1], [0, 0, 1, 1], [], []>} : vector<2x32xbf16>, vector<32x96xbf16>, vector<2x96xf32> -> vector<2x96xf32>
    %19 = arith.addf %18, %10 : vector<2x96xf32>
    %20 = vector.extract_strided_slice %19 {offsets = [0, 0], sizes = [2, 48], strides = [1, 1]} : vector<2x96xf32> to vector<2x48xf32>
    %21 = vector.extract_strided_slice %19 {offsets = [0, 48], sizes = [2, 48], strides = [1, 1]} : vector<2x96xf32> to vector<2x48xf32>
    %22 = vector.extract_strided_slice %5 {offsets = [0, 0], sizes = [2, 48], strides = [1, 1]} : vector<16x48xf32> to vector<2x48xf32>
    %23 = vector.extract_strided_slice %22 {offsets = [0, 0], sizes = [2, 16], strides = [1, 1]} : vector<2x48xf32> to vector<2x16xf32>
    %24 = vector.extract_strided_slice %20 {offsets = [0, 0], sizes = [2, 16], strides = [1, 1]} : vector<2x48xf32> to vector<2x16xf32>
    %25 = arith.addf %23, %24 : vector<2x16xf32>
    %26 = arith.negf %25 : vector<2x16xf32>
    %27 = math.exp %26 : vector<2x16xf32>
    %cst_16 = arith.constant 1.000000e+00 : f32
    %28 = vector.broadcast %cst_16 : f32 to vector<2x16xf32>
    %29 = arith.addf %28, %27 : vector<2x16xf32>
    %30 = arith.divf %28, %29 : vector<2x16xf32>
    %31 = vector.extract_strided_slice %22 {offsets = [0, 16], sizes = [2, 16], strides = [1, 1]} : vector<2x48xf32> to vector<2x16xf32>
    %32 = vector.extract_strided_slice %20 {offsets = [0, 16], sizes = [2, 16], strides = [1, 1]} : vector<2x48xf32> to vector<2x16xf32>
    %33 = arith.addf %31, %32 : vector<2x16xf32>
    %34 = arith.negf %33 : vector<2x16xf32>
    %35 = math.exp %34 : vector<2x16xf32>
    %cst_17 = arith.constant 1.000000e+00 : f32
    %36 = vector.broadcast %cst_17 : f32 to vector<2x16xf32>
    %37 = arith.addf %36, %35 : vector<2x16xf32>
    %38 = arith.divf %36, %37 : vector<2x16xf32>
    %39 = vector.extract_strided_slice %22 {offsets = [0, 32], sizes = [2, 16], strides = [1, 1]} : vector<2x48xf32> to vector<2x16xf32>
    %40 = vector.extract_strided_slice %20 {offsets = [0, 32], sizes = [2, 16], strides = [1, 1]} : vector<2x48xf32> to vector<2x16xf32>
    %41 = arith.mulf %30, %40 : vector<2x16xf32>
    %42 = arith.addf %39, %41 : vector<2x16xf32>
    %43 = math.tanh %42 : vector<2x16xf32>
    %44 = arith.subf %14, %43 : vector<2x16xf32>
    %45 = arith.mulf %38, %44 : vector<2x16xf32>
    %46 = arith.addf %43, %45 : vector<2x16xf32>
    %47 = arith.truncf %46 : vector<2x16xf32> to vector<2x16xbf16>
    %cst_18 = arith.constant dense<0.000000e+00> : vector<2x48xf32>
    %48 = tpu.matmul %47, %7, %cst_18 {dimension_numbers = #tpu.dot_dimension_numbers<[1], [0], [0], [1], [0, 0, 1, 1], [], []>} : vector<2x16xbf16>, vector<16x48xbf16>, vector<2x48xf32> -> vector<2x48xf32>
    %49 = arith.addf %48, %13 : vector<2x48xf32>
    %50 = vector.extract_strided_slice %49 {offsets = [0, 0], sizes = [2, 16], strides = [1, 1]} : vector<2x48xf32> to vector<2x16xf32>
    %51 = vector.extract_strided_slice %21 {offsets = [0, 0], sizes = [2, 16], strides = [1, 1]} : vector<2x48xf32> to vector<2x16xf32>
    %52 = arith.addf %50, %51 : vector<2x16xf32>
    %53 = arith.negf %52 : vector<2x16xf32>
    %54 = math.exp %53 : vector<2x16xf32>
    %cst_19 = arith.constant 1.000000e+00 : f32
    %55 = vector.broadcast %cst_19 : f32 to vector<2x16xf32>
    %56 = arith.addf %55, %54 : vector<2x16xf32>
    %57 = arith.divf %55, %56 : vector<2x16xf32>
    %58 = vector.extract_strided_slice %49 {offsets = [0, 16], sizes = [2, 16], strides = [1, 1]} : vector<2x48xf32> to vector<2x16xf32>
    %59 = vector.extract_strided_slice %21 {offsets = [0, 16], sizes = [2, 16], strides = [1, 1]} : vector<2x48xf32> to vector<2x16xf32>
    %60 = arith.addf %58, %59 : vector<2x16xf32>
    %61 = arith.negf %60 : vector<2x16xf32>
    %62 = math.exp %61 : vector<2x16xf32>
    %cst_20 = arith.constant 1.000000e+00 : f32
    %63 = vector.broadcast %cst_20 : f32 to vector<2x16xf32>
    %64 = arith.addf %63, %62 : vector<2x16xf32>
    %65 = arith.divf %63, %64 : vector<2x16xf32>
    %66 = vector.extract_strided_slice %49 {offsets = [0, 32], sizes = [2, 16], strides = [1, 1]} : vector<2x48xf32> to vector<2x16xf32>
    %67 = vector.extract_strided_slice %21 {offsets = [0, 32], sizes = [2, 16], strides = [1, 1]} : vector<2x48xf32> to vector<2x16xf32>
    %68 = arith.mulf %57, %67 : vector<2x16xf32>
    %69 = arith.addf %66, %68 : vector<2x16xf32>
    %70 = math.tanh %69 : vector<2x16xf32>
    %71 = arith.subf %15, %70 : vector<2x16xf32>
    %72 = arith.mulf %65, %71 : vector<2x16xf32>
    %73 = arith.addf %70, %72 : vector<2x16xf32>
    %74 = tpu.concatenate %46, %73 in 1 : vector<2x16xf32>, vector<2x16xf32> -> vector<2x32xf32>
    %75 = arith.truncf %74 : vector<2x32xf32> to vector<2x32xbf16>
    %cst_21 = arith.constant dense<0.000000e+00> : vector<2x96xf32>
    %76 = tpu.matmul %75, %6, %cst_21 {dimension_numbers = #tpu.dot_dimension_numbers<[1], [0], [0], [1], [0, 0, 1, 1], [], []>} : vector<2x32xbf16>, vector<32x96xbf16>, vector<2x96xf32> -> vector<2x96xf32>
    %77 = arith.addf %76, %10 : vector<2x96xf32>
    %78 = vector.extract_strided_slice %77 {offsets = [0, 0], sizes = [2, 48], strides = [1, 1]} : vector<2x96xf32> to vector<2x48xf32>
    %79 = vector.extract_strided_slice %77 {offsets = [0, 48], sizes = [2, 48], strides = [1, 1]} : vector<2x96xf32> to vector<2x48xf32>
    %80 = vector.extract_strided_slice %5 {offsets = [2, 0], sizes = [2, 48], strides = [1, 1]} : vector<16x48xf32> to vector<2x48xf32>
    %81 = vector.extract_strided_slice %80 {offsets = [0, 0], sizes = [2, 16], strides = [1, 1]} : vector<2x48xf32> to vector<2x16xf32>
    %82 = vector.extract_strided_slice %78 {offsets = [0, 0], sizes = [2, 16], strides = [1, 1]} : vector<2x48xf32> to vector<2x16xf32>
    %83 = arith.addf %81, %82 : vector<2x16xf32>
    %84 = arith.negf %83 : vector<2x16xf32>
    %85 = math.exp %84 : vector<2x16xf32>
    %cst_22 = arith.constant 1.000000e+00 : f32
    %86 = vector.broadcast %cst_22 : f32 to vector<2x16xf32>
    %87 = arith.addf %86, %85 : vector<2x16xf32>
    %88 = arith.divf %86, %87 : vector<2x16xf32>
    %89 = vector.extract_strided_slice %80 {offsets = [0, 16], sizes = [2, 16], strides = [1, 1]} : vector<2x48xf32> to vector<2x16xf32>
    %90 = vector.extract_strided_slice %78 {offsets = [0, 16], sizes = [2, 16], strides = [1, 1]} : vector<2x48xf32> to vector<2x16xf32>
    %91 = arith.addf %89, %90 : vector<2x16xf32>
    %92 = arith.negf %91 : vector<2x16xf32>
    %93 = math.exp %92 : vector<2x16xf32>
    %cst_23 = arith.constant 1.000000e+00 : f32
    %94 = vector.broadcast %cst_23 : f32 to vector<2x16xf32>
    %95 = arith.addf %94, %93 : vector<2x16xf32>
    %96 = arith.divf %94, %95 : vector<2x16xf32>
    %97 = vector.extract_strided_slice %80 {offsets = [0, 32], sizes = [2, 16], strides = [1, 1]} : vector<2x48xf32> to vector<2x16xf32>
    %98 = vector.extract_strided_slice %78 {offsets = [0, 32], sizes = [2, 16], strides = [1, 1]} : vector<2x48xf32> to vector<2x16xf32>
    %99 = arith.mulf %88, %98 : vector<2x16xf32>
    %100 = arith.addf %97, %99 : vector<2x16xf32>
    %101 = math.tanh %100 : vector<2x16xf32>
    %102 = arith.subf %46, %101 : vector<2x16xf32>
    %103 = arith.mulf %96, %102 : vector<2x16xf32>
    %104 = arith.addf %101, %103 : vector<2x16xf32>
    %105 = arith.truncf %104 : vector<2x16xf32> to vector<2x16xbf16>
    %cst_24 = arith.constant dense<0.000000e+00> : vector<2x48xf32>
    %106 = tpu.matmul %105, %7, %cst_24 {dimension_numbers = #tpu.dot_dimension_numbers<[1], [0], [0], [1], [0, 0, 1, 1], [], []>} : vector<2x16xbf16>, vector<16x48xbf16>, vector<2x48xf32> -> vector<2x48xf32>
    %107 = arith.addf %106, %13 : vector<2x48xf32>
    %108 = vector.extract_strided_slice %107 {offsets = [0, 0], sizes = [2, 16], strides = [1, 1]} : vector<2x48xf32> to vector<2x16xf32>
    %109 = vector.extract_strided_slice %79 {offsets = [0, 0], sizes = [2, 16], strides = [1, 1]} : vector<2x48xf32> to vector<2x16xf32>
    %110 = arith.addf %108, %109 : vector<2x16xf32>
    %111 = arith.negf %110 : vector<2x16xf32>
    %112 = math.exp %111 : vector<2x16xf32>
    %cst_25 = arith.constant 1.000000e+00 : f32
    %113 = vector.broadcast %cst_25 : f32 to vector<2x16xf32>
    %114 = arith.addf %113, %112 : vector<2x16xf32>
    %115 = arith.divf %113, %114 : vector<2x16xf32>
    %116 = vector.extract_strided_slice %107 {offsets = [0, 16], sizes = [2, 16], strides = [1, 1]} : vector<2x48xf32> to vector<2x16xf32>
    %117 = vector.extract_strided_slice %79 {offsets = [0, 16], sizes = [2, 16], strides = [1, 1]} : vector<2x48xf32> to vector<2x16xf32>
    %118 = arith.addf %116, %117 : vector<2x16xf32>
    %119 = arith.negf %118 : vector<2x16xf32>
    %120 = math.exp %119 : vector<2x16xf32>
    %cst_26 = arith.constant 1.000000e+00 : f32
    %121 = vector.broadcast %cst_26 : f32 to vector<2x16xf32>
    %122 = arith.addf %121, %120 : vector<2x16xf32>
    %123 = arith.divf %121, %122 : vector<2x16xf32>
    %124 = vector.extract_strided_slice %107 {offsets = [0, 32], sizes = [2, 16], strides = [1, 1]} : vector<2x48xf32> to vector<2x16xf32>
    %125 = vector.extract_strided_slice %79 {offsets = [0, 32], sizes = [2, 16], strides = [1, 1]} : vector<2x48xf32> to vector<2x16xf32>
    %126 = arith.mulf %115, %125 : vector<2x16xf32>
    %127 = arith.addf %124, %126 : vector<2x16xf32>
    %128 = math.tanh %127 : vector<2x16xf32>
    %129 = arith.subf %73, %128 : vector<2x16xf32>
    %130 = arith.mulf %123, %129 : vector<2x16xf32>
    %131 = arith.addf %128, %130 : vector<2x16xf32>
    %132 = tpu.concatenate %104, %131 in 1 : vector<2x16xf32>, vector<2x16xf32> -> vector<2x32xf32>
    %133 = arith.truncf %132 : vector<2x32xf32> to vector<2x32xbf16>
    %cst_27 = arith.constant dense<0.000000e+00> : vector<2x96xf32>
    %134 = tpu.matmul %133, %6, %cst_27 {dimension_numbers = #tpu.dot_dimension_numbers<[1], [0], [0], [1], [0, 0, 1, 1], [], []>} : vector<2x32xbf16>, vector<32x96xbf16>, vector<2x96xf32> -> vector<2x96xf32>
    %135 = arith.addf %134, %10 : vector<2x96xf32>
    %136 = vector.extract_strided_slice %135 {offsets = [0, 0], sizes = [2, 48], strides = [1, 1]} : vector<2x96xf32> to vector<2x48xf32>
    %137 = vector.extract_strided_slice %135 {offsets = [0, 48], sizes = [2, 48], strides = [1, 1]} : vector<2x96xf32> to vector<2x48xf32>
    %138 = vector.extract_strided_slice %5 {offsets = [4, 0], sizes = [2, 48], strides = [1, 1]} : vector<16x48xf32> to vector<2x48xf32>
    %139 = vector.extract_strided_slice %138 {offsets = [0, 0], sizes = [2, 16], strides = [1, 1]} : vector<2x48xf32> to vector<2x16xf32>
    %140 = vector.extract_strided_slice %136 {offsets = [0, 0], sizes = [2, 16], strides = [1, 1]} : vector<2x48xf32> to vector<2x16xf32>
    %141 = arith.addf %139, %140 : vector<2x16xf32>
    %142 = arith.negf %141 : vector<2x16xf32>
    %143 = math.exp %142 : vector<2x16xf32>
    %cst_28 = arith.constant 1.000000e+00 : f32
    %144 = vector.broadcast %cst_28 : f32 to vector<2x16xf32>
    %145 = arith.addf %144, %143 : vector<2x16xf32>
    %146 = arith.divf %144, %145 : vector<2x16xf32>
    %147 = vector.extract_strided_slice %138 {offsets = [0, 16], sizes = [2, 16], strides = [1, 1]} : vector<2x48xf32> to vector<2x16xf32>
    %148 = vector.extract_strided_slice %136 {offsets = [0, 16], sizes = [2, 16], strides = [1, 1]} : vector<2x48xf32> to vector<2x16xf32>
    %149 = arith.addf %147, %148 : vector<2x16xf32>
    %150 = arith.negf %149 : vector<2x16xf32>
    %151 = math.exp %150 : vector<2x16xf32>
    %cst_29 = arith.constant 1.000000e+00 : f32
    %152 = vector.broadcast %cst_29 : f32 to vector<2x16xf32>
    %153 = arith.addf %152, %151 : vector<2x16xf32>
    %154 = arith.divf %152, %153 : vector<2x16xf32>
    %155 = vector.extract_strided_slice %138 {offsets = [0, 32], sizes = [2, 16], strides = [1, 1]} : vector<2x48xf32> to vector<2x16xf32>
    %156 = vector.extract_strided_slice %136 {offsets = [0, 32], sizes = [2, 16], strides = [1, 1]} : vector<2x48xf32> to vector<2x16xf32>
    %157 = arith.mulf %146, %156 : vector<2x16xf32>
    %158 = arith.addf %155, %157 : vector<2x16xf32>
    %159 = math.tanh %158 : vector<2x16xf32>
    %160 = arith.subf %104, %159 : vector<2x16xf32>
    %161 = arith.mulf %154, %160 : vector<2x16xf32>
    %162 = arith.addf %159, %161 : vector<2x16xf32>
    %163 = arith.truncf %162 : vector<2x16xf32> to vector<2x16xbf16>
    %cst_30 = arith.constant dense<0.000000e+00> : vector<2x48xf32>
    %164 = tpu.matmul %163, %7, %cst_30 {dimension_numbers = #tpu.dot_dimension_numbers<[1], [0], [0], [1], [0, 0, 1, 1], [], []>} : vector<2x16xbf16>, vector<16x48xbf16>, vector<2x48xf32> -> vector<2x48xf32>
    %165 = arith.addf %164, %13 : vector<2x48xf32>
    %166 = vector.extract_strided_slice %165 {offsets = [0, 0], sizes = [2, 16], strides = [1, 1]} : vector<2x48xf32> to vector<2x16xf32>
    %167 = vector.extract_strided_slice %137 {offsets = [0, 0], sizes = [2, 16], strides = [1, 1]} : vector<2x48xf32> to vector<2x16xf32>
    %168 = arith.addf %166, %167 : vector<2x16xf32>
    %169 = arith.negf %168 : vector<2x16xf32>
    %170 = math.exp %169 : vector<2x16xf32>
    %cst_31 = arith.constant 1.000000e+00 : f32
    %171 = vector.broadcast %cst_31 : f32 to vector<2x16xf32>
    %172 = arith.addf %171, %170 : vector<2x16xf32>
    %173 = arith.divf %171, %172 : vector<2x16xf32>
    %174 = vector.extract_strided_slice %165 {offsets = [0, 16], sizes = [2, 16], strides = [1, 1]} : vector<2x48xf32> to vector<2x16xf32>
    %175 = vector.extract_strided_slice %137 {offsets = [0, 16], sizes = [2, 16], strides = [1, 1]} : vector<2x48xf32> to vector<2x16xf32>
    %176 = arith.addf %174, %175 : vector<2x16xf32>
    %177 = arith.negf %176 : vector<2x16xf32>
    %178 = math.exp %177 : vector<2x16xf32>
    %cst_32 = arith.constant 1.000000e+00 : f32
    %179 = vector.broadcast %cst_32 : f32 to vector<2x16xf32>
    %180 = arith.addf %179, %178 : vector<2x16xf32>
    %181 = arith.divf %179, %180 : vector<2x16xf32>
    %182 = vector.extract_strided_slice %165 {offsets = [0, 32], sizes = [2, 16], strides = [1, 1]} : vector<2x48xf32> to vector<2x16xf32>
    %183 = vector.extract_strided_slice %137 {offsets = [0, 32], sizes = [2, 16], strides = [1, 1]} : vector<2x48xf32> to vector<2x16xf32>
    %184 = arith.mulf %173, %183 : vector<2x16xf32>
    %185 = arith.addf %182, %184 : vector<2x16xf32>
    %186 = math.tanh %185 : vector<2x16xf32>
    %187 = arith.subf %131, %186 : vector<2x16xf32>
    %188 = arith.mulf %181, %187 : vector<2x16xf32>
    %189 = arith.addf %186, %188 : vector<2x16xf32>
    %190 = tpu.concatenate %162, %189 in 1 : vector<2x16xf32>, vector<2x16xf32> -> vector<2x32xf32>
    %191 = arith.truncf %190 : vector<2x32xf32> to vector<2x32xbf16>
    %cst_33 = arith.constant dense<0.000000e+00> : vector<2x96xf32>
    %192 = tpu.matmul %191, %6, %cst_33 {dimension_numbers = #tpu.dot_dimension_numbers<[1], [0], [0], [1], [0, 0, 1, 1], [], []>} : vector<2x32xbf16>, vector<32x96xbf16>, vector<2x96xf32> -> vector<2x96xf32>
    %193 = arith.addf %192, %10 : vector<2x96xf32>
    %194 = vector.extract_strided_slice %193 {offsets = [0, 0], sizes = [2, 48], strides = [1, 1]} : vector<2x96xf32> to vector<2x48xf32>
    %195 = vector.extract_strided_slice %193 {offsets = [0, 48], sizes = [2, 48], strides = [1, 1]} : vector<2x96xf32> to vector<2x48xf32>
    %196 = vector.extract_strided_slice %5 {offsets = [6, 0], sizes = [2, 48], strides = [1, 1]} : vector<16x48xf32> to vector<2x48xf32>
    %197 = vector.extract_strided_slice %196 {offsets = [0, 0], sizes = [2, 16], strides = [1, 1]} : vector<2x48xf32> to vector<2x16xf32>
    %198 = vector.extract_strided_slice %194 {offsets = [0, 0], sizes = [2, 16], strides = [1, 1]} : vector<2x48xf32> to vector<2x16xf32>
    %199 = arith.addf %197, %198 : vector<2x16xf32>
    %200 = arith.negf %199 : vector<2x16xf32>
    %201 = math.exp %200 : vector<2x16xf32>
    %cst_34 = arith.constant 1.000000e+00 : f32
    %202 = vector.broadcast %cst_34 : f32 to vector<2x16xf32>
    %203 = arith.addf %202, %201 : vector<2x16xf32>
    %204 = arith.divf %202, %203 : vector<2x16xf32>
    %205 = vector.extract_strided_slice %196 {offsets = [0, 16], sizes = [2, 16], strides = [1, 1]} : vector<2x48xf32> to vector<2x16xf32>
    %206 = vector.extract_strided_slice %194 {offsets = [0, 16], sizes = [2, 16], strides = [1, 1]} : vector<2x48xf32> to vector<2x16xf32>
    %207 = arith.addf %205, %206 : vector<2x16xf32>
    %208 = arith.negf %207 : vector<2x16xf32>
    %209 = math.exp %208 : vector<2x16xf32>
    %cst_35 = arith.constant 1.000000e+00 : f32
    %210 = vector.broadcast %cst_35 : f32 to vector<2x16xf32>
    %211 = arith.addf %210, %209 : vector<2x16xf32>
    %212 = arith.divf %210, %211 : vector<2x16xf32>
    %213 = vector.extract_strided_slice %196 {offsets = [0, 32], sizes = [2, 16], strides = [1, 1]} : vector<2x48xf32> to vector<2x16xf32>
    %214 = vector.extract_strided_slice %194 {offsets = [0, 32], sizes = [2, 16], strides = [1, 1]} : vector<2x48xf32> to vector<2x16xf32>
    %215 = arith.mulf %204, %214 : vector<2x16xf32>
    %216 = arith.addf %213, %215 : vector<2x16xf32>
    %217 = math.tanh %216 : vector<2x16xf32>
    %218 = arith.subf %162, %217 : vector<2x16xf32>
    %219 = arith.mulf %212, %218 : vector<2x16xf32>
    %220 = arith.addf %217, %219 : vector<2x16xf32>
    %221 = arith.truncf %220 : vector<2x16xf32> to vector<2x16xbf16>
    %cst_36 = arith.constant dense<0.000000e+00> : vector<2x48xf32>
    %222 = tpu.matmul %221, %7, %cst_36 {dimension_numbers = #tpu.dot_dimension_numbers<[1], [0], [0], [1], [0, 0, 1, 1], [], []>} : vector<2x16xbf16>, vector<16x48xbf16>, vector<2x48xf32> -> vector<2x48xf32>
    %223 = arith.addf %222, %13 : vector<2x48xf32>
    %224 = vector.extract_strided_slice %223 {offsets = [0, 0], sizes = [2, 16], strides = [1, 1]} : vector<2x48xf32> to vector<2x16xf32>
    %225 = vector.extract_strided_slice %195 {offsets = [0, 0], sizes = [2, 16], strides = [1, 1]} : vector<2x48xf32> to vector<2x16xf32>
    %226 = arith.addf %224, %225 : vector<2x16xf32>
    %227 = arith.negf %226 : vector<2x16xf32>
    %228 = math.exp %227 : vector<2x16xf32>
    %cst_37 = arith.constant 1.000000e+00 : f32
    %229 = vector.broadcast %cst_37 : f32 to vector<2x16xf32>
    %230 = arith.addf %229, %228 : vector<2x16xf32>
    %231 = arith.divf %229, %230 : vector<2x16xf32>
    %232 = vector.extract_strided_slice %223 {offsets = [0, 16], sizes = [2, 16], strides = [1, 1]} : vector<2x48xf32> to vector<2x16xf32>
    %233 = vector.extract_strided_slice %195 {offsets = [0, 16], sizes = [2, 16], strides = [1, 1]} : vector<2x48xf32> to vector<2x16xf32>
    %234 = arith.addf %232, %233 : vector<2x16xf32>
    %235 = arith.negf %234 : vector<2x16xf32>
    %236 = math.exp %235 : vector<2x16xf32>
    %cst_38 = arith.constant 1.000000e+00 : f32
    %237 = vector.broadcast %cst_38 : f32 to vector<2x16xf32>
    %238 = arith.addf %237, %236 : vector<2x16xf32>
    %239 = arith.divf %237, %238 : vector<2x16xf32>
    %240 = vector.extract_strided_slice %223 {offsets = [0, 32], sizes = [2, 16], strides = [1, 1]} : vector<2x48xf32> to vector<2x16xf32>
    %241 = vector.extract_strided_slice %195 {offsets = [0, 32], sizes = [2, 16], strides = [1, 1]} : vector<2x48xf32> to vector<2x16xf32>
    %242 = arith.mulf %231, %241 : vector<2x16xf32>
    %243 = arith.addf %240, %242 : vector<2x16xf32>
    %244 = math.tanh %243 : vector<2x16xf32>
    %245 = arith.subf %189, %244 : vector<2x16xf32>
    %246 = arith.mulf %239, %245 : vector<2x16xf32>
    %247 = arith.addf %244, %246 : vector<2x16xf32>
    %248 = tpu.concatenate %220, %247 in 1 : vector<2x16xf32>, vector<2x16xf32> -> vector<2x32xf32>
    %249 = arith.truncf %248 : vector<2x32xf32> to vector<2x32xbf16>
    %cst_39 = arith.constant dense<0.000000e+00> : vector<2x96xf32>
    %250 = tpu.matmul %249, %6, %cst_39 {dimension_numbers = #tpu.dot_dimension_numbers<[1], [0], [0], [1], [0, 0, 1, 1], [], []>} : vector<2x32xbf16>, vector<32x96xbf16>, vector<2x96xf32> -> vector<2x96xf32>
    %251 = arith.addf %250, %10 : vector<2x96xf32>
    %252 = vector.extract_strided_slice %251 {offsets = [0, 0], sizes = [2, 48], strides = [1, 1]} : vector<2x96xf32> to vector<2x48xf32>
    %253 = vector.extract_strided_slice %251 {offsets = [0, 48], sizes = [2, 48], strides = [1, 1]} : vector<2x96xf32> to vector<2x48xf32>
    %254 = vector.extract_strided_slice %5 {offsets = [8, 0], sizes = [2, 48], strides = [1, 1]} : vector<16x48xf32> to vector<2x48xf32>
    %255 = vector.extract_strided_slice %254 {offsets = [0, 0], sizes = [2, 16], strides = [1, 1]} : vector<2x48xf32> to vector<2x16xf32>
    %256 = vector.extract_strided_slice %252 {offsets = [0, 0], sizes = [2, 16], strides = [1, 1]} : vector<2x48xf32> to vector<2x16xf32>
    %257 = arith.addf %255, %256 : vector<2x16xf32>
    %258 = arith.negf %257 : vector<2x16xf32>
    %259 = math.exp %258 : vector<2x16xf32>
    %cst_40 = arith.constant 1.000000e+00 : f32
    %260 = vector.broadcast %cst_40 : f32 to vector<2x16xf32>
    %261 = arith.addf %260, %259 : vector<2x16xf32>
    %262 = arith.divf %260, %261 : vector<2x16xf32>
    %263 = vector.extract_strided_slice %254 {offsets = [0, 16], sizes = [2, 16], strides = [1, 1]} : vector<2x48xf32> to vector<2x16xf32>
    %264 = vector.extract_strided_slice %252 {offsets = [0, 16], sizes = [2, 16], strides = [1, 1]} : vector<2x48xf32> to vector<2x16xf32>
    %265 = arith.addf %263, %264 : vector<2x16xf32>
    %266 = arith.negf %265 : vector<2x16xf32>
    %267 = math.exp %266 : vector<2x16xf32>
    %cst_41 = arith.constant 1.000000e+00 : f32
    %268 = vector.broadcast %cst_41 : f32 to vector<2x16xf32>
    %269 = arith.addf %268, %267 : vector<2x16xf32>
    %270 = arith.divf %268, %269 : vector<2x16xf32>
    %271 = vector.extract_strided_slice %254 {offsets = [0, 32], sizes = [2, 16], strides = [1, 1]} : vector<2x48xf32> to vector<2x16xf32>
    %272 = vector.extract_strided_slice %252 {offsets = [0, 32], sizes = [2, 16], strides = [1, 1]} : vector<2x48xf32> to vector<2x16xf32>
    %273 = arith.mulf %262, %272 : vector<2x16xf32>
    %274 = arith.addf %271, %273 : vector<2x16xf32>
    %275 = math.tanh %274 : vector<2x16xf32>
    %276 = arith.subf %220, %275 : vector<2x16xf32>
    %277 = arith.mulf %270, %276 : vector<2x16xf32>
    %278 = arith.addf %275, %277 : vector<2x16xf32>
    %279 = arith.truncf %278 : vector<2x16xf32> to vector<2x16xbf16>
    %cst_42 = arith.constant dense<0.000000e+00> : vector<2x48xf32>
    %280 = tpu.matmul %279, %7, %cst_42 {dimension_numbers = #tpu.dot_dimension_numbers<[1], [0], [0], [1], [0, 0, 1, 1], [], []>} : vector<2x16xbf16>, vector<16x48xbf16>, vector<2x48xf32> -> vector<2x48xf32>
    %281 = arith.addf %280, %13 : vector<2x48xf32>
    %282 = vector.extract_strided_slice %281 {offsets = [0, 0], sizes = [2, 16], strides = [1, 1]} : vector<2x48xf32> to vector<2x16xf32>
    %283 = vector.extract_strided_slice %253 {offsets = [0, 0], sizes = [2, 16], strides = [1, 1]} : vector<2x48xf32> to vector<2x16xf32>
    %284 = arith.addf %282, %283 : vector<2x16xf32>
    %285 = arith.negf %284 : vector<2x16xf32>
    %286 = math.exp %285 : vector<2x16xf32>
    %cst_43 = arith.constant 1.000000e+00 : f32
    %287 = vector.broadcast %cst_43 : f32 to vector<2x16xf32>
    %288 = arith.addf %287, %286 : vector<2x16xf32>
    %289 = arith.divf %287, %288 : vector<2x16xf32>
    %290 = vector.extract_strided_slice %281 {offsets = [0, 16], sizes = [2, 16], strides = [1, 1]} : vector<2x48xf32> to vector<2x16xf32>
    %291 = vector.extract_strided_slice %253 {offsets = [0, 16], sizes = [2, 16], strides = [1, 1]} : vector<2x48xf32> to vector<2x16xf32>
    %292 = arith.addf %290, %291 : vector<2x16xf32>
    %293 = arith.negf %292 : vector<2x16xf32>
    %294 = math.exp %293 : vector<2x16xf32>
    %cst_44 = arith.constant 1.000000e+00 : f32
    %295 = vector.broadcast %cst_44 : f32 to vector<2x16xf32>
    %296 = arith.addf %295, %294 : vector<2x16xf32>
    %297 = arith.divf %295, %296 : vector<2x16xf32>
    %298 = vector.extract_strided_slice %281 {offsets = [0, 32], sizes = [2, 16], strides = [1, 1]} : vector<2x48xf32> to vector<2x16xf32>
    %299 = vector.extract_strided_slice %253 {offsets = [0, 32], sizes = [2, 16], strides = [1, 1]} : vector<2x48xf32> to vector<2x16xf32>
    %300 = arith.mulf %289, %299 : vector<2x16xf32>
    %301 = arith.addf %298, %300 : vector<2x16xf32>
    %302 = math.tanh %301 : vector<2x16xf32>
    %303 = arith.subf %247, %302 : vector<2x16xf32>
    %304 = arith.mulf %297, %303 : vector<2x16xf32>
    %305 = arith.addf %302, %304 : vector<2x16xf32>
    %306 = tpu.concatenate %278, %305 in 1 : vector<2x16xf32>, vector<2x16xf32> -> vector<2x32xf32>
    %307 = arith.truncf %306 : vector<2x32xf32> to vector<2x32xbf16>
    %cst_45 = arith.constant dense<0.000000e+00> : vector<2x96xf32>
    %308 = tpu.matmul %307, %6, %cst_45 {dimension_numbers = #tpu.dot_dimension_numbers<[1], [0], [0], [1], [0, 0, 1, 1], [], []>} : vector<2x32xbf16>, vector<32x96xbf16>, vector<2x96xf32> -> vector<2x96xf32>
    %309 = arith.addf %308, %10 : vector<2x96xf32>
    %310 = vector.extract_strided_slice %309 {offsets = [0, 0], sizes = [2, 48], strides = [1, 1]} : vector<2x96xf32> to vector<2x48xf32>
    %311 = vector.extract_strided_slice %309 {offsets = [0, 48], sizes = [2, 48], strides = [1, 1]} : vector<2x96xf32> to vector<2x48xf32>
    %312 = vector.extract_strided_slice %5 {offsets = [10, 0], sizes = [2, 48], strides = [1, 1]} : vector<16x48xf32> to vector<2x48xf32>
    %313 = vector.extract_strided_slice %312 {offsets = [0, 0], sizes = [2, 16], strides = [1, 1]} : vector<2x48xf32> to vector<2x16xf32>
    %314 = vector.extract_strided_slice %310 {offsets = [0, 0], sizes = [2, 16], strides = [1, 1]} : vector<2x48xf32> to vector<2x16xf32>
    %315 = arith.addf %313, %314 : vector<2x16xf32>
    %316 = arith.negf %315 : vector<2x16xf32>
    %317 = math.exp %316 : vector<2x16xf32>
    %cst_46 = arith.constant 1.000000e+00 : f32
    %318 = vector.broadcast %cst_46 : f32 to vector<2x16xf32>
    %319 = arith.addf %318, %317 : vector<2x16xf32>
    %320 = arith.divf %318, %319 : vector<2x16xf32>
    %321 = vector.extract_strided_slice %312 {offsets = [0, 16], sizes = [2, 16], strides = [1, 1]} : vector<2x48xf32> to vector<2x16xf32>
    %322 = vector.extract_strided_slice %310 {offsets = [0, 16], sizes = [2, 16], strides = [1, 1]} : vector<2x48xf32> to vector<2x16xf32>
    %323 = arith.addf %321, %322 : vector<2x16xf32>
    %324 = arith.negf %323 : vector<2x16xf32>
    %325 = math.exp %324 : vector<2x16xf32>
    %cst_47 = arith.constant 1.000000e+00 : f32
    %326 = vector.broadcast %cst_47 : f32 to vector<2x16xf32>
    %327 = arith.addf %326, %325 : vector<2x16xf32>
    %328 = arith.divf %326, %327 : vector<2x16xf32>
    %329 = vector.extract_strided_slice %312 {offsets = [0, 32], sizes = [2, 16], strides = [1, 1]} : vector<2x48xf32> to vector<2x16xf32>
    %330 = vector.extract_strided_slice %310 {offsets = [0, 32], sizes = [2, 16], strides = [1, 1]} : vector<2x48xf32> to vector<2x16xf32>
    %331 = arith.mulf %320, %330 : vector<2x16xf32>
    %332 = arith.addf %329, %331 : vector<2x16xf32>
    %333 = math.tanh %332 : vector<2x16xf32>
    %334 = arith.subf %278, %333 : vector<2x16xf32>
    %335 = arith.mulf %328, %334 : vector<2x16xf32>
    %336 = arith.addf %333, %335 : vector<2x16xf32>
    %337 = arith.truncf %336 : vector<2x16xf32> to vector<2x16xbf16>
    %cst_48 = arith.constant dense<0.000000e+00> : vector<2x48xf32>
    %338 = tpu.matmul %337, %7, %cst_48 {dimension_numbers = #tpu.dot_dimension_numbers<[1], [0], [0], [1], [0, 0, 1, 1], [], []>} : vector<2x16xbf16>, vector<16x48xbf16>, vector<2x48xf32> -> vector<2x48xf32>
    %339 = arith.addf %338, %13 : vector<2x48xf32>
    %340 = vector.extract_strided_slice %339 {offsets = [0, 0], sizes = [2, 16], strides = [1, 1]} : vector<2x48xf32> to vector<2x16xf32>
    %341 = vector.extract_strided_slice %311 {offsets = [0, 0], sizes = [2, 16], strides = [1, 1]} : vector<2x48xf32> to vector<2x16xf32>
    %342 = arith.addf %340, %341 : vector<2x16xf32>
    %343 = arith.negf %342 : vector<2x16xf32>
    %344 = math.exp %343 : vector<2x16xf32>
    %cst_49 = arith.constant 1.000000e+00 : f32
    %345 = vector.broadcast %cst_49 : f32 to vector<2x16xf32>
    %346 = arith.addf %345, %344 : vector<2x16xf32>
    %347 = arith.divf %345, %346 : vector<2x16xf32>
    %348 = vector.extract_strided_slice %339 {offsets = [0, 16], sizes = [2, 16], strides = [1, 1]} : vector<2x48xf32> to vector<2x16xf32>
    %349 = vector.extract_strided_slice %311 {offsets = [0, 16], sizes = [2, 16], strides = [1, 1]} : vector<2x48xf32> to vector<2x16xf32>
    %350 = arith.addf %348, %349 : vector<2x16xf32>
    %351 = arith.negf %350 : vector<2x16xf32>
    %352 = math.exp %351 : vector<2x16xf32>
    %cst_50 = arith.constant 1.000000e+00 : f32
    %353 = vector.broadcast %cst_50 : f32 to vector<2x16xf32>
    %354 = arith.addf %353, %352 : vector<2x16xf32>
    %355 = arith.divf %353, %354 : vector<2x16xf32>
    %356 = vector.extract_strided_slice %339 {offsets = [0, 32], sizes = [2, 16], strides = [1, 1]} : vector<2x48xf32> to vector<2x16xf32>
    %357 = vector.extract_strided_slice %311 {offsets = [0, 32], sizes = [2, 16], strides = [1, 1]} : vector<2x48xf32> to vector<2x16xf32>
    %358 = arith.mulf %347, %357 : vector<2x16xf32>
    %359 = arith.addf %356, %358 : vector<2x16xf32>
    %360 = math.tanh %359 : vector<2x16xf32>
    %361 = arith.subf %305, %360 : vector<2x16xf32>
    %362 = arith.mulf %355, %361 : vector<2x16xf32>
    %363 = arith.addf %360, %362 : vector<2x16xf32>
    %364 = tpu.concatenate %336, %363 in 1 : vector<2x16xf32>, vector<2x16xf32> -> vector<2x32xf32>
    %365 = arith.truncf %364 : vector<2x32xf32> to vector<2x32xbf16>
    %cst_51 = arith.constant dense<0.000000e+00> : vector<2x96xf32>
    %366 = tpu.matmul %365, %6, %cst_51 {dimension_numbers = #tpu.dot_dimension_numbers<[1], [0], [0], [1], [0, 0, 1, 1], [], []>} : vector<2x32xbf16>, vector<32x96xbf16>, vector<2x96xf32> -> vector<2x96xf32>
    %367 = arith.addf %366, %10 : vector<2x96xf32>
    %368 = vector.extract_strided_slice %367 {offsets = [0, 0], sizes = [2, 48], strides = [1, 1]} : vector<2x96xf32> to vector<2x48xf32>
    %369 = vector.extract_strided_slice %367 {offsets = [0, 48], sizes = [2, 48], strides = [1, 1]} : vector<2x96xf32> to vector<2x48xf32>
    %370 = vector.extract_strided_slice %5 {offsets = [12, 0], sizes = [2, 48], strides = [1, 1]} : vector<16x48xf32> to vector<2x48xf32>
    %371 = vector.extract_strided_slice %370 {offsets = [0, 0], sizes = [2, 16], strides = [1, 1]} : vector<2x48xf32> to vector<2x16xf32>
    %372 = vector.extract_strided_slice %368 {offsets = [0, 0], sizes = [2, 16], strides = [1, 1]} : vector<2x48xf32> to vector<2x16xf32>
    %373 = arith.addf %371, %372 : vector<2x16xf32>
    %374 = arith.negf %373 : vector<2x16xf32>
    %375 = math.exp %374 : vector<2x16xf32>
    %cst_52 = arith.constant 1.000000e+00 : f32
    %376 = vector.broadcast %cst_52 : f32 to vector<2x16xf32>
    %377 = arith.addf %376, %375 : vector<2x16xf32>
    %378 = arith.divf %376, %377 : vector<2x16xf32>
    %379 = vector.extract_strided_slice %370 {offsets = [0, 16], sizes = [2, 16], strides = [1, 1]} : vector<2x48xf32> to vector<2x16xf32>
    %380 = vector.extract_strided_slice %368 {offsets = [0, 16], sizes = [2, 16], strides = [1, 1]} : vector<2x48xf32> to vector<2x16xf32>
    %381 = arith.addf %379, %380 : vector<2x16xf32>
    %382 = arith.negf %381 : vector<2x16xf32>
    %383 = math.exp %382 : vector<2x16xf32>
    %cst_53 = arith.constant 1.000000e+00 : f32
    %384 = vector.broadcast %cst_53 : f32 to vector<2x16xf32>
    %385 = arith.addf %384, %383 : vector<2x16xf32>
    %386 = arith.divf %384, %385 : vector<2x16xf32>
    %387 = vector.extract_strided_slice %370 {offsets = [0, 32], sizes = [2, 16], strides = [1, 1]} : vector<2x48xf32> to vector<2x16xf32>
    %388 = vector.extract_strided_slice %368 {offsets = [0, 32], sizes = [2, 16], strides = [1, 1]} : vector<2x48xf32> to vector<2x16xf32>
    %389 = arith.mulf %378, %388 : vector<2x16xf32>
    %390 = arith.addf %387, %389 : vector<2x16xf32>
    %391 = math.tanh %390 : vector<2x16xf32>
    %392 = arith.subf %336, %391 : vector<2x16xf32>
    %393 = arith.mulf %386, %392 : vector<2x16xf32>
    %394 = arith.addf %391, %393 : vector<2x16xf32>
    %395 = arith.truncf %394 : vector<2x16xf32> to vector<2x16xbf16>
    %cst_54 = arith.constant dense<0.000000e+00> : vector<2x48xf32>
    %396 = tpu.matmul %395, %7, %cst_54 {dimension_numbers = #tpu.dot_dimension_numbers<[1], [0], [0], [1], [0, 0, 1, 1], [], []>} : vector<2x16xbf16>, vector<16x48xbf16>, vector<2x48xf32> -> vector<2x48xf32>
    %397 = arith.addf %396, %13 : vector<2x48xf32>
    %398 = vector.extract_strided_slice %397 {offsets = [0, 0], sizes = [2, 16], strides = [1, 1]} : vector<2x48xf32> to vector<2x16xf32>
    %399 = vector.extract_strided_slice %369 {offsets = [0, 0], sizes = [2, 16], strides = [1, 1]} : vector<2x48xf32> to vector<2x16xf32>
    %400 = arith.addf %398, %399 : vector<2x16xf32>
    %401 = arith.negf %400 : vector<2x16xf32>
    %402 = math.exp %401 : vector<2x16xf32>
    %cst_55 = arith.constant 1.000000e+00 : f32
    %403 = vector.broadcast %cst_55 : f32 to vector<2x16xf32>
    %404 = arith.addf %403, %402 : vector<2x16xf32>
    %405 = arith.divf %403, %404 : vector<2x16xf32>
    %406 = vector.extract_strided_slice %397 {offsets = [0, 16], sizes = [2, 16], strides = [1, 1]} : vector<2x48xf32> to vector<2x16xf32>
    %407 = vector.extract_strided_slice %369 {offsets = [0, 16], sizes = [2, 16], strides = [1, 1]} : vector<2x48xf32> to vector<2x16xf32>
    %408 = arith.addf %406, %407 : vector<2x16xf32>
    %409 = arith.negf %408 : vector<2x16xf32>
    %410 = math.exp %409 : vector<2x16xf32>
    %cst_56 = arith.constant 1.000000e+00 : f32
    %411 = vector.broadcast %cst_56 : f32 to vector<2x16xf32>
    %412 = arith.addf %411, %410 : vector<2x16xf32>
    %413 = arith.divf %411, %412 : vector<2x16xf32>
    %414 = vector.extract_strided_slice %397 {offsets = [0, 32], sizes = [2, 16], strides = [1, 1]} : vector<2x48xf32> to vector<2x16xf32>
    %415 = vector.extract_strided_slice %369 {offsets = [0, 32], sizes = [2, 16], strides = [1, 1]} : vector<2x48xf32> to vector<2x16xf32>
    %416 = arith.mulf %405, %415 : vector<2x16xf32>
    %417 = arith.addf %414, %416 : vector<2x16xf32>
    %418 = math.tanh %417 : vector<2x16xf32>
    %419 = arith.subf %363, %418 : vector<2x16xf32>
    %420 = arith.mulf %413, %419 : vector<2x16xf32>
    %421 = arith.addf %418, %420 : vector<2x16xf32>
    %422 = tpu.concatenate %394, %421 in 1 : vector<2x16xf32>, vector<2x16xf32> -> vector<2x32xf32>
    %423 = arith.truncf %422 : vector<2x32xf32> to vector<2x32xbf16>
    %cst_57 = arith.constant dense<0.000000e+00> : vector<2x96xf32>
    %424 = tpu.matmul %423, %6, %cst_57 {dimension_numbers = #tpu.dot_dimension_numbers<[1], [0], [0], [1], [0, 0, 1, 1], [], []>} : vector<2x32xbf16>, vector<32x96xbf16>, vector<2x96xf32> -> vector<2x96xf32>
    %425 = arith.addf %424, %10 : vector<2x96xf32>
    %426 = vector.extract_strided_slice %425 {offsets = [0, 0], sizes = [2, 48], strides = [1, 1]} : vector<2x96xf32> to vector<2x48xf32>
    %427 = vector.extract_strided_slice %425 {offsets = [0, 48], sizes = [2, 48], strides = [1, 1]} : vector<2x96xf32> to vector<2x48xf32>
    %428 = vector.extract_strided_slice %5 {offsets = [14, 0], sizes = [2, 48], strides = [1, 1]} : vector<16x48xf32> to vector<2x48xf32>
    %429 = vector.extract_strided_slice %428 {offsets = [0, 0], sizes = [2, 16], strides = [1, 1]} : vector<2x48xf32> to vector<2x16xf32>
    %430 = vector.extract_strided_slice %426 {offsets = [0, 0], sizes = [2, 16], strides = [1, 1]} : vector<2x48xf32> to vector<2x16xf32>
    %431 = arith.addf %429, %430 : vector<2x16xf32>
    %432 = arith.negf %431 : vector<2x16xf32>
    %433 = math.exp %432 : vector<2x16xf32>
    %cst_58 = arith.constant 1.000000e+00 : f32
    %434 = vector.broadcast %cst_58 : f32 to vector<2x16xf32>
    %435 = arith.addf %434, %433 : vector<2x16xf32>
    %436 = arith.divf %434, %435 : vector<2x16xf32>
    %437 = vector.extract_strided_slice %428 {offsets = [0, 16], sizes = [2, 16], strides = [1, 1]} : vector<2x48xf32> to vector<2x16xf32>
    %438 = vector.extract_strided_slice %426 {offsets = [0, 16], sizes = [2, 16], strides = [1, 1]} : vector<2x48xf32> to vector<2x16xf32>
    %439 = arith.addf %437, %438 : vector<2x16xf32>
    %440 = arith.negf %439 : vector<2x16xf32>
    %441 = math.exp %440 : vector<2x16xf32>
    %cst_59 = arith.constant 1.000000e+00 : f32
    %442 = vector.broadcast %cst_59 : f32 to vector<2x16xf32>
    %443 = arith.addf %442, %441 : vector<2x16xf32>
    %444 = arith.divf %442, %443 : vector<2x16xf32>
    %445 = vector.extract_strided_slice %428 {offsets = [0, 32], sizes = [2, 16], strides = [1, 1]} : vector<2x48xf32> to vector<2x16xf32>
    %446 = vector.extract_strided_slice %426 {offsets = [0, 32], sizes = [2, 16], strides = [1, 1]} : vector<2x48xf32> to vector<2x16xf32>
    %447 = arith.mulf %436, %446 : vector<2x16xf32>
    %448 = arith.addf %445, %447 : vector<2x16xf32>
    %449 = math.tanh %448 : vector<2x16xf32>
    %450 = arith.subf %394, %449 : vector<2x16xf32>
    %451 = arith.mulf %444, %450 : vector<2x16xf32>
    %452 = arith.addf %449, %451 : vector<2x16xf32>
    %453 = arith.truncf %452 : vector<2x16xf32> to vector<2x16xbf16>
    %cst_60 = arith.constant dense<0.000000e+00> : vector<2x48xf32>
    %454 = tpu.matmul %453, %7, %cst_60 {dimension_numbers = #tpu.dot_dimension_numbers<[1], [0], [0], [1], [0, 0, 1, 1], [], []>} : vector<2x16xbf16>, vector<16x48xbf16>, vector<2x48xf32> -> vector<2x48xf32>
    %455 = arith.addf %454, %13 : vector<2x48xf32>
    %456 = vector.extract_strided_slice %455 {offsets = [0, 0], sizes = [2, 16], strides = [1, 1]} : vector<2x48xf32> to vector<2x16xf32>
    %457 = vector.extract_strided_slice %427 {offsets = [0, 0], sizes = [2, 16], strides = [1, 1]} : vector<2x48xf32> to vector<2x16xf32>
    %458 = arith.addf %456, %457 : vector<2x16xf32>
    %459 = arith.negf %458 : vector<2x16xf32>
    %460 = math.exp %459 : vector<2x16xf32>
    %cst_61 = arith.constant 1.000000e+00 : f32
    %461 = vector.broadcast %cst_61 : f32 to vector<2x16xf32>
    %462 = arith.addf %461, %460 : vector<2x16xf32>
    %463 = arith.divf %461, %462 : vector<2x16xf32>
    %464 = vector.extract_strided_slice %455 {offsets = [0, 16], sizes = [2, 16], strides = [1, 1]} : vector<2x48xf32> to vector<2x16xf32>
    %465 = vector.extract_strided_slice %427 {offsets = [0, 16], sizes = [2, 16], strides = [1, 1]} : vector<2x48xf32> to vector<2x16xf32>
    %466 = arith.addf %464, %465 : vector<2x16xf32>
    %467 = arith.negf %466 : vector<2x16xf32>
    %468 = math.exp %467 : vector<2x16xf32>
    %cst_62 = arith.constant 1.000000e+00 : f32
    %469 = vector.broadcast %cst_62 : f32 to vector<2x16xf32>
    %470 = arith.addf %469, %468 : vector<2x16xf32>
    %471 = arith.divf %469, %470 : vector<2x16xf32>
    %472 = vector.extract_strided_slice %455 {offsets = [0, 32], sizes = [2, 16], strides = [1, 1]} : vector<2x48xf32> to vector<2x16xf32>
    %473 = vector.extract_strided_slice %427 {offsets = [0, 32], sizes = [2, 16], strides = [1, 1]} : vector<2x48xf32> to vector<2x16xf32>
    %474 = arith.mulf %463, %473 : vector<2x16xf32>
    %475 = arith.addf %472, %474 : vector<2x16xf32>
    %476 = math.tanh %475 : vector<2x16xf32>
    %477 = arith.subf %421, %476 : vector<2x16xf32>
    %478 = arith.mulf %471, %477 : vector<2x16xf32>
    %479 = arith.addf %476, %478 : vector<2x16xf32>
    %480 = tpu.concatenate %73, %131, %189, %247, %305, %363, %421, %479 in 0 : vector<2x16xf32>, vector<2x16xf32>, vector<2x16xf32>, vector<2x16xf32>, vector<2x16xf32>, vector<2x16xf32>, vector<2x16xf32>, vector<2x16xf32> -> vector<16x16xf32>
    %481 = arith.truncf %480 : vector<16x16xf32> to vector<16x16xbf16>
    %c0_63 = arith.constant 0 : index
    %c0_64 = arith.constant 0 : index
    %482 = vector.load %arg7[%c0_63, %c0_64] : memref<16x16xbf16, #tpu.memory_space<vmem>>, vector<16x16xbf16>
    %cst_65 = arith.constant dense<0.000000e+00> : vector<16x16xf32>
    %483 = tpu.matmul %481, %482, %cst_65 {dimension_numbers = #tpu.dot_dimension_numbers<[1], [0], [0], [1], [0, 0, 1, 1], [], []>} : vector<16x16xbf16>, vector<16x16xbf16>, vector<16x16xf32> -> vector<16x16xf32>
    %c0_66 = arith.constant 0 : index
    %c0_67 = arith.constant 0 : index
    %484 = vector.load %arg8[%c0_66, %c0_67] : memref<1x16xf32, #tpu.memory_space<vmem>>, vector<1x16xf32>
    %485 = vector.broadcast %484 : vector<1x16xf32> to vector<16x16xf32>
    %486 = arith.addf %483, %485 : vector<16x16xf32>
    %487 = arith.negf %486 : vector<16x16xf32>
    %488 = math.exp %487 : vector<16x16xf32>
    %cst_68 = arith.constant 1.000000e+00 : f32
    %489 = vector.broadcast %cst_68 : f32 to vector<16x16xf32>
    %490 = arith.addf %489, %488 : vector<16x16xf32>
    %491 = arith.divf %489, %490 : vector<16x16xf32>
    %c0_69 = arith.constant 0 : index
    %c0_70 = arith.constant 0 : index
    %492 = vector.load %arg9[%c0_69, %c0_70] : memref<16x16xf32, #tpu.memory_space<vmem>>, vector<16x16xf32>
    tpu.vector_store %arg9[%c0_69, %c0_70], %491 {strides = array<i32>} : memref<16x16xf32, #tpu.memory_space<vmem>>, vector<16x16xf32>,
    return
  }
}

</mosaic_0001>

<llo_original>
// kernel: recovery_forward.1
$region0: #{recovery_forward.1}
  #allocation0 [shape = 'u32[]', space=smem, size = 0x4, offset = 0x4, fixed_abs, tag = 'smem constant byte address 0x4 - core index']
  #allocation1 [shape = 'u32[144,128]{1,0:T(1,128)}', space=vmem, size = 0x12000, scoped, tag = 'internal scratch']
  %s0 = inlined_call_operand.vmem [shape: bf16[16,32], index: 0, kind: input, shape index: {}]
  %s1 = inlined_call_operand.vmem [shape: bf16[32,48], index: 1, kind: input, shape index: {}]
  %s2 = inlined_call_operand.vmem [shape: f32[1,48], index: 2, kind: input, shape index: {}]
  %s3 = inlined_call_operand.vmem [shape: bf16[32,96], index: 3, kind: input, shape index: {}]
  %s4 = inlined_call_operand.hbm [shape: f32[1,96], index: 4, kind: input, shape index: {}]
  %s5 = inlined_call_operand.vmem [shape: bf16[16,48], index: 5, kind: input, shape index: {}]
  %s6 = inlined_call_operand.hbm [shape: f32[1,48], index: 6, kind: input, shape index: {}]
  %s7 = inlined_call_operand.vmem [shape: bf16[16,16], index: 7, kind: input, shape index: {}]
  %s8 = inlined_call_operand.hbm [shape: f32[1,16], index: 8, kind: input, shape index: {}]
  %s9 = inlined_call_operand.vmem [shape: f32[16,16], index: 9, kind: output, shape index: {}]
  %s10 = sld [smem:[#allocation0]]
  $region58: #{recovery_forward.1} parent=0
    _
  %s12 = ssub.s32 1, %s10
  %s13 = scalar_select 0, %s12, %s10
  $region1: #{recovery_forward.1} parent=0
    #allocation2 [shape = 'u8[512]{0}', space=vmem, size = 0x400, scoped, tag = 'input window, operand 4, single buffered']
    #allocation3 [shape = 's32[1]{0}', space=sflag, size = 0x4, scoped, tag = 'scoped memory for recovery_forward.1']
    #allocation4 [shape = 'u8[512]{0}', space=vmem, size = 0x400, scoped, tag = 'input window, operand 6, single buffered']
    #allocation5 [shape = 's32[1]{0}', space=sflag, size = 0x4, scoped, tag = 'scoped memory for recovery_forward.1']
    #allocation6 [shape = 'u8[512]{0}', space=vmem, size = 0x400, scoped, tag = 'input window, operand 8, single buffered']
    %14 = vsyncpa [#allocation3], 0
    %15 = vsyncpa [#allocation5], 0
    // Predicated region
    $region2: #{recovery_forward.1} parent=1 // pred_check
      _
    $region3: #{recovery_forward.1} parent=1 // pred_check_branch
      %17 = sbr.rel (0) target = $region5
    $region4: #{recovery_forward.1} parent=1 // pred_region
      _
    $region5: #{recovery_forward.1} parent=1 // pred_fallthru
      _
    // Predicated region
    $region6: #{recovery_forward.1} parent=1 // pred_check
      _
    $region7: #{recovery_forward.1} parent=1 // pred_check_branch
      %19 = sbr.rel (0) target = $region9
    $region8: #{recovery_forward.1} parent=1 // pred_region
      _
    $region9: #{recovery_forward.1} parent=1 // pred_fallthru
      _
    // Predicated region
    $region10: #{recovery_forward.1} parent=1 // pred_check
      _
    $region11: #{recovery_forward.1} parent=1 // pred_check_branch
      %21 = sbr.rel (0) target = $region13
    $region12: #{recovery_forward.1} parent=1 // pred_region
      _
    $region13: #{recovery_forward.1} parent=1 // pred_fallthru
      _
    // Predicated region
    $region14: #{recovery_forward.1} parent=1 // pred_check
      _
    $region15: #{recovery_forward.1} parent=1 // pred_check_branch
      %23 = sbr.rel (0) target = $region17
    $region16: #{recovery_forward.1} parent=1 // pred_region
      _
    $region17: #{recovery_forward.1} parent=1 // pred_fallthru
      _
    // Predicated region
    $region18: #{recovery_forward.1} parent=1 // pred_check
      _
    $region19: #{recovery_forward.1} parent=1 // pred_check_branch
      %25 = sbr.rel (0) target = $region21
    $region20: #{recovery_forward.1} parent=1 // pred_region
      %s27 = ssub.s32 16, 16
      %28 = vsyncadd [#allocation3], %s27
      %s30 = sshll.u32 [#allocation2], 4
      %s31 = int_to_ptr.vmem [resolvable:$true] %s30
      %33 = dma.hbm_to_vmem [thread:$0]  %s4, 16, %s31, [#allocation3]
    $region21: #{recovery_forward.1} parent=1 // pred_fallthru
      _
    // Predicated region
    $region22: #{recovery_forward.1} parent=1 // pred_check
      _
    $region23: #{recovery_forward.1} parent=1 // pred_check_branch
      %35 = sbr.rel (0) target = $region25
    $region24: #{recovery_forward.1} parent=1 // pred_region
      _
    $region25: #{recovery_forward.1} parent=1 // pred_fallthru
      _
    // Predicated region
    $region26: #{recovery_forward.1} parent=1 // pred_check
      _
    $region27: #{recovery_forward.1} parent=1 // pred_check_branch
      %37 = sbr.rel (0) target = $region29
    $region28: #{recovery_forward.1} parent=1 // pred_region
      %s39 = ssub.s32 16, 16
      %40 = vsyncadd [#allocation5], %s39
      %s42 = sshll.u32 [#allocation4], 4
      %s43 = int_to_ptr.vmem [resolvable:$true] %s42
      %45 = dma.hbm_to_vmem [thread:$0]  %s6, 16, %s43, [#allocation5]
    $region29: #{recovery_forward.1} parent=1 // pred_fallthru
      _
    // Predicated region
    $region30: #{recovery_forward.1} parent=1 // pred_check
      _
    $region31: #{recovery_forward.1} parent=1 // pred_check_branch
      %47 = sbr.rel (0) target = $region33
    $region32: #{recovery_forward.1} parent=1 // pred_region
      _
    $region33: #{recovery_forward.1} parent=1 // pred_fallthru
      _
    // Predicated region
    $region34: #{recovery_forward.1} parent=1 // pred_check
      _
    $region35: #{recovery_forward.1} parent=1 // pred_check_branch
      %49 = sbr.rel (0) target = $region37
    $region36: #{recovery_forward.1} parent=1 // pred_region
      %s51 = ssub.s32 16, 16
      %52 = vsyncadd [#allocation5], %s51
      %s54 = sshll.u32 [#allocation6], 4
      %s55 = int_to_ptr.vmem [resolvable:$true] %s54
      %57 = dma.hbm_to_vmem [thread:$0]  %s8, 16, %s55, [#allocation5]
    $region37: #{recovery_forward.1} parent=1 // pred_fallthru
      _
    // Predicated region
    $region38: #{recovery_forward.1} parent=1 // pred_check
      _
    $region39: #{recovery_forward.1} parent=1 // pred_check_branch
      %59 = sbr.rel (0) target = $region41
    $region40: #{recovery_forward.1} parent=1 // pred_region
      %60 = dma.done [#allocation3], 16
    $region41: #{recovery_forward.1} parent=1 // pred_fallthru
      _
    // Predicated region
    $region42: #{recovery_forward.1} parent=1 // pred_check
      _
    $region43: #{recovery_forward.1} parent=1 // pred_check_branch
      %62 = sbr.rel (0) target = $region45
    $region44: #{recovery_forward.1} parent=1 // pred_region
      %63 = dma.done [#allocation5], 16
    $region45: #{recovery_forward.1} parent=1 // pred_fallthru
      _
    // Predicated region
    $region46: #{recovery_forward.1} parent=1 // pred_check
      _
    $region47: #{recovery_forward.1} parent=1 // pred_check_branch
      %65 = sbr.rel (0) target = $region49
    $region48: #{recovery_forward.1} parent=1 // pred_region
      %66 = dma.done [#allocation5], 16
    $region49: #{recovery_forward.1} parent=1 // pred_fallthru
      _
    %v68 = vld [vmem:[%s0] sm:$0xf]
    %v69 = vld [vmem:[%s0 + $0x4] sm:$0xf]
    %v70 = vld [vmem:[%s1] sm:$0xf]
    %v71 = vld [vmem:[%s1 + $0x4] sm:$0xf]
    %v72 = vld [vmem:[%s1 + $0x8] sm:$0xf]
    %v73 = vld [vmem:[%s1 + $0xc] sm:$0xf]
    %v74 = vld [vmem:[%s2] sm:$0x1]
    %v76 = vlaneseq
    %v77 = vshrl.u32 %v76, 7
    %v78 = vsub.s32 0, %v77
    %v79 = vrot.slane %v74, %v78
    %v83 = vunpack.c.l.b16 %v68
    %v84 = vunpack.c.l.b16 %v69
    %v85 = vpack.c.b16 %v84, %v83
    %v90 = vunpack.c.l.b16 %v70
    %v91 = vunpack.c.l.b16 %v71
    %v92 = vunpack.c.l.b16 %v72
    %v93 = vunpack.c.l.b16 %v73
    %v94 = vpack.c.b16 %v91, %v90
    %v95 = vpack.c.b16 %v93, %v92
    %vm98 = vcmask 261120
    %v100 = vsel %vm98, %v85, 0
    %102 = vmatprep.subr.bf16.mxu0 0
    %103 = vmatpush1.bf16.msra.mxu0 0
    %104 = vmatprep.subr.bf16.mxu0 0
    %105 = vmatpush1.bf16.msra.mxu0 0
    %106 = vmatprep.subr.bf16.mxu0 0
    %107 = vmatpush1.bf16.msra.mxu0 0
    %108 = vmatprep.subr.bf16.mxu0 0
    %109 = vmatpush1.bf16.msra.mxu0 0
    %110 = vmatprep.subr.bf16.mxu0 0
    %111 = vmatpush1.bf16.msra.mxu0 0
    %112 = vmatprep.subr.bf16.mxu0 0
    %113 = vmatpush1.bf16.msra.mxu0 0
    %114 = vmatprep.subr.bf16.mxu0 0
    %115 = vmatpush1.bf16.msra.mxu0 %v95
    %116 = vmatprep.subr.bf16.mxu0 0
    %117 = vmatpush1.bf16.msra.mxu0 %v94
    %118 = vmatprep.subr.bf16.mxu0 0
    %119 = vmatpush2.bf16.msra.mxu0 0
    %120 = vmatprep.subr.bf16.mxu0 0
    %121 = vmatpush2.bf16.msra.mxu0 0
    %122 = vmatprep.subr.bf16.mxu0 0
    %123 = vmatpush2.bf16.msra.mxu0 0
    %124 = vmatprep.subr.bf16.mxu0 0
    %125 = vmatpush2.bf16.msra.mxu0 0
    %126 = vmatprep.subr.bf16.mxu0 0
    %127 = vmatpush2.bf16.msra.mxu0 0
    %128 = vmatprep.subr.bf16.mxu0 0
    %129 = vmatpush2.bf16.msra.mxu0 0
    %130 = vmatprep.subr.bf16.mxu0 0
    %131 = vmatpush2.bf16.msra.mxu0 0
    %132 = vmatprep.subr.bf16.mxu0 0
    %133 = vmatpush2.bf16.msra.mxu0 0
    %134 = vmatprep.mubr.bf16.mxu0 0
    %135 = vmatmul.mubr.bf16.gmra.mxu0 %v100
    %v136 = vpop.f32.mrf.mxu0
    %v137 = vadd.f32 %v79, %v136
    %v138 = vpop.f32.mrf.mxu0
    %v139 = vpop.f32.mrf.mxu0
    %v140 = vadd.f32 %v79, %v139
    %v141 = vpop.f32.mrf.mxu0
    %142 = vdwg.mxu0
    %v143 = vld [vmem:[%s3] sm:$0xf]
    %v144 = vld [vmem:[%s3 + $0x4] sm:$0xf]
    %v145 = vld [vmem:[%s3 + $0x8] sm:$0xf]
    %v146 = vld [vmem:[%s3 + $0xc] sm:$0xf]
    %v147 = vld [vmem:[%s5] sm:$0xf]
    %v148 = vld [vmem:[%s5 + $0x4] sm:$0xf]
    %v149 = vld [vmem:[#allocation2] sm:$0x1]
    %v151 = vlaneseq
    %v152 = vshrl.u32 %v151, 7
    %v153 = vsub.s32 0, %v152
    %v154 = vrot.slane %v149, %v153
    %v156 = vld [vmem:[#allocation4] sm:$0x1]
    %v158 = vlaneseq
    %v159 = vshrl.u32 %v158, 7
    %v160 = vsub.s32 0, %v159
    %v161 = vrot.slane %v156, %v160
    %v163 = vpack.c.bf16 0.0, 0.0
    %v168 = vunpack.c.l.b16 %v143
    %v169 = vunpack.c.l.b16 %v144
    %v170 = vunpack.c.l.b16 %v145
    %v171 = vunpack.c.l.b16 %v146
    %v172 = vpack.c.b16 %v169, %v168
    %v173 = vpack.c.b16 %v171, %v170
    %v177 = vsel %vm98, %v163, 0
    %179 = vmatprep.subr.bf16.mxu0 0
    %180 = vmatpush1.bf16.msra.mxu0 0
    %181 = vmatprep.subr.bf16.mxu0 0
    %182 = vmatpush1.bf16.msra.mxu0 0
    %183 = vmatprep.subr.bf16.mxu0 0
    %184 = vmatpush1.bf16.msra.mxu0 0
    %185 = vmatprep.subr.bf16.mxu0 0
    %186 = vmatpush1.bf16.msra.mxu0 0
    %187 = vmatprep.subr.bf16.mxu0 0
    %188 = vmatpush1.bf16.msra.mxu0 0
    %189 = vmatprep.subr.bf16.mxu0 0
    %190 = vmatpush1.bf16.msra.mxu0 0
    %191 = vmatprep.subr.bf16.mxu0 0
    %192 = vmatpush1.bf16.msra.mxu0 %v173
    %193 = vmatprep.subr.bf16.mxu0 0
    %194 = vmatpush1.bf16.msra.mxu0 %v172
    %195 = vmatprep.subr.bf16.mxu0 0
    %196 = vmatpush2.bf16.msra.mxu0 0
    %197 = vmatprep.subr.bf16.mxu0 0
    %198 = vmatpush2.bf16.msra.mxu0 0
    %199 = vmatprep.subr.bf16.mxu0 0
    %200 = vmatpush2.bf16.msra.mxu0 0
    %201 = vmatprep.subr.bf16.mxu0 0
    %202 = vmatpush2.bf16.msra.mxu0 0
    %203 = vmatprep.subr.bf16.mxu0 0
    %204 = vmatpush2.bf16.msra.mxu0 0
    %205 = vmatprep.subr.bf16.mxu0 0
    %206 = vmatpush2.bf16.msra.mxu0 0
    %207 = vmatprep.subr.bf16.mxu0 0
    %208 = vmatpush2.bf16.msra.mxu0 0
    %209 = vmatprep.subr.bf16.mxu0 0
    %210 = vmatpush2.bf16.msra.mxu0 0
    %211 = vmatprep.mubr.bf16.mxu0 0
    %212 = vmatmul.mubr.bf16.gmra.mxu0 %v177
    %v213 = vpop.f32.mrf.mxu0
    %v214 = vadd.f32 %v154, %v213
    %v215 = vpop.f32.mrf.mxu0
    %v216 = vpop.f32.mrf.mxu0
    %v217 = vpop.f32.mrf.mxu0
    %218 = vdwg.mxu0
    %v219 = vadd.f32 %v137, %v214
    %v220 = vxor.u32 %v219, 2147483648
    %v221 = vmul.f32 %v220, 1.442695
    %v222 = vpow.pop %v221
    %v223 = vadd.f32 %v222, 1.0
    %v224 = vrcp.pop %v223
    %v225 = vmul.f32 1.0, %v224
    %227 = vrot.lane.b32.xlu0 %v214, 96
    %v228 = vpop.permute.xlu0 %227
    %v230 = vmul.f32 %v225, %v228
    %232 = vrot.lane.b32.xlu0 %v230, 32
    %v233 = vpop.permute.xlu0 %232
    %v235 = vadd.f32 %v137, %v233
    %v236 = vtanh.pop %v235
    %v237 = vsub.f32 0.0, %v236
    %239 = vrot.lane.b32.xlu0 %v237, 112
    %v240 = vpop.permute.xlu0 %239
    %v242 = vmul.f32 %v225, %v240
    %244 = vrot.lane.b32.xlu0 %v242, 16
    %v245 = vpop.permute.xlu0 %244
    %v247 = vadd.f32 %v236, %v245
    %v248 = vpack.c.bf16 %v247, %v247
    %250 = vrot.lane.b32.xlu0 %v248, 96
    %v251 = vpop.permute.xlu0 %250
    %v254 = vunpack.c.l.b16 %v147
    %v255 = vunpack.c.l.b16 %v148
    %v256 = vpack.c.b16 %v255, %v254
    %vm258 = vcmask 130048
    %v260 = vsel %vm258, %v251, 0
    %262 = vmatprep.subr.bf16.mxu0 0
    %263 = vmatpush1.bf16.msra.mxu0 0
    %264 = vmatprep.subr.bf16.mxu0 0
    %265 = vmatpush1.bf16.msra.mxu0 0
    %266 = vmatprep.subr.bf16.mxu0 0
    %267 = vmatpush1.bf16.msra.mxu0 0
    %268 = vmatprep.subr.bf16.mxu0 0
    %269 = vmatpush1.bf16.msra.mxu0 0
    %270 = vmatprep.subr.bf16.mxu0 0
    %271 = vmatpush1.bf16.msra.mxu0 0
    %272 = vmatprep.subr.bf16.mxu0 0
    %273 = vmatpush1.bf16.msra.mxu0 0
    %274 = vmatprep.subr.bf16.mxu0 0
    %275 = vmatpush1.bf16.msra.mxu0 0
    %276 = vmatprep.subr.bf16.mxu0 0
    %277 = vmatpush1.bf16.msra.mxu0 %v256
    %278 = vmatprep.subr.bf16.mxu0 0
    %279 = vmatpush2.bf16.msra.mxu0 0
    %280 = vmatprep.subr.bf16.mxu0 0
    %281 = vmatpush2.bf16.msra.mxu0 0
    %282 = vmatprep.subr.bf16.mxu0 0
    %283 = vmatpush2.bf16.msra.mxu0 0
    %284 = vmatprep.subr.bf16.mxu0 0
    %285 = vmatpush2.bf16.msra.mxu0 0
    %286 = vmatprep.subr.bf16.mxu0 0
    %287 = vmatpush2.bf16.msra.mxu0 0
    %288 = vmatprep.subr.bf16.mxu0 0
    %289 = vmatpush2.bf16.msra.mxu0 0
    %290 = vmatprep.subr.bf16.mxu0 0
    %291 = vmatpush2.bf16.msra.mxu0 0
    %292 = vmatprep.subr.bf16.mxu0 0
    %293 = vmatpush2.bf16.msra.mxu0 0
    %294 = vmatprep.mubr.bf16.mxu0 0
    %295 = vmatmul.mubr.bf16.gmra.mxu0 %v260
    %v296 = vpop.f32.mrf.mxu0
    %v297 = vadd.f32 %v161, %v296
    %v298 = vpop.f32.mrf.mxu0
    %v299 = vpop.f32.mrf.mxu0
    %v300 = vpop.f32.mrf.mxu0
    %301 = vdwg.mxu0
    %302 = vrot.lane.b32.xlu0 %v214, 80
    %v303 = vpop.permute.xlu0 %302
    %v305 = vadd.f32 %v297, %v303
    %v306 = vxor.u32 %v305, 2147483648
    %v307 = vmul.f32 %v306, 1.442695
    %v308 = vpow.pop %v307
    %v309 = vadd.f32 %v308, 1.0
    %v310 = vrcp.pop %v309
    %v311 = vmul.f32 1.0, %v310
    %312 = vrot.lane.b32.xlu0 %v214, 48
    %v313 = vpop.permute.xlu0 %312
    %v315 = vmul.f32 %v311, %v313
    %317 = vrot.lane.b32.xlu0 %v315, 32
    %v318 = vpop.permute.xlu0 %317
    %v320 = vadd.f32 %v297, %v318
    %v321 = vtanh.pop %v320
    %v322 = vsub.f32 0.0, %v321
    %324 = vrot.lane.b32.xlu0 %v322, 112
    %v325 = vpop.permute.xlu0 %324
    %v327 = vmul.f32 %v311, %v325
    %329 = vrot.lane.b32.xlu0 %v327, 16
    %v330 = vpop.permute.xlu0 %329
    %v332 = vadd.f32 %v321, %v330
    %334 = vrot.lane.b32.xlu0 %v247, 96
    %v335 = vpop.permute.xlu0 %334
    %338 = vrot.lane.b32.xlu0 %v332, 112
    %v339 = vpop.permute.xlu0 %338
    %v341 = vsel %vm258, %v335, %v339
    %v342 = vpack.c.bf16 %v341, %v341
    %v344 = vsel %vm98, %v342, 0
    %346 = vmatprep.subr.bf16.mxu0 0
    %347 = vmatpush1.bf16.msra.mxu0 0
    %348 = vmatprep.subr.bf16.mxu0 0
    %349 = vmatpush1.bf16.msra.mxu0 0
    %350 = vmatprep.subr.bf16.mxu0 0
    %351 = vmatpush1.bf16.msra.mxu0 0
    %352 = vmatprep.subr.bf16.mxu0 0
    %353 = vmatpush1.bf16.msra.mxu0 0
    %354 = vmatprep.subr.bf16.mxu0 0
    %355 = vmatpush1.bf16.msra.mxu0 0
    %356 = vmatprep.subr.bf16.mxu0 0
    %357 = vmatpush1.bf16.msra.mxu0 0
    %358 = vmatprep.subr.bf16.mxu0 0
    %359 = vmatpush1.bf16.msra.mxu0 %v173
    %360 = vmatprep.subr.bf16.mxu0 0
    %361 = vmatpush1.bf16.msra.mxu0 %v172
    %362 = vmatprep.subr.bf16.mxu0 0
    %363 = vmatpush2.bf16.msra.mxu0 0
    %364 = vmatprep.subr.bf16.mxu0 0
    %365 = vmatpush2.bf16.msra.mxu0 0
    %366 = vmatprep.subr.bf16.mxu0 0
    %367 = vmatpush2.bf16.msra.mxu0 0
    %368 = vmatprep.subr.bf16.mxu0 0
    %369 = vmatpush2.bf16.msra.mxu0 0
    %370 = vmatprep.subr.bf16.mxu0 0
    %371 = vmatpush2.bf16.msra.mxu0 0
    %372 = vmatprep.subr.bf16.mxu0 0
    %373 = vmatpush2.bf16.msra.mxu0 0
    %374 = vmatprep.subr.bf16.mxu0 0
    %375 = vmatpush2.bf16.msra.mxu0 0
    %376 = vmatprep.subr.bf16.mxu0 0
    %377 = vmatpush2.bf16.msra.mxu0 0
    %378 = vmatprep.mubr.bf16.mxu0 0
    %379 = vmatmul.mubr.bf16.gmra.mxu0 %v344
    %v380 = vpop.f32.mrf.mxu0
    %v381 = vadd.f32 %v154, %v380
    %v382 = vpop.f32.mrf.mxu0
    %v383 = vpop.f32.mrf.mxu0
    %v384 = vpop.f32.mrf.mxu0
    %385 = vdwg.mxu0
    %v387 = vrot.slane %v381, 6
    %v389 = vadd.f32 %v137, %v387
    %v390 = vxor.u32 %v389, 2147483648
    %v391 = vmul.f32 %v390, 1.442695
    %v392 = vpow.pop %v391
    %v393 = vadd.f32 %v392, 1.0
    %v394 = vrcp.pop %v393
    %v395 = vmul.f32 1.0, %v394
    %396 = vrot.lane.b32.xlu0 %v387, 96
    %v397 = vpop.permute.xlu0 %396
    %v399 = vmul.f32 %v395, %v397
    %401 = vrot.lane.b32.xlu0 %v399, 32
    %v402 = vpop.permute.xlu0 %401
    %v404 = vadd.f32 %v137, %v402
    %v405 = vtanh.pop %v404
    %v407 = vrot.slane %v405, 2
    %v409 = vsub.f32 %v247, %v407
    %v411 = vrot.slane %v409, 6
    %412 = vrot.lane.b32.xlu0 %v411, 112
    %v413 = vpop.permute.xlu0 %412
    %v415 = vmul.f32 %v395, %v413
    %417 = vrot.lane.b32.xlu0 %v415, 16
    %v418 = vpop.permute.xlu0 %417
    %v420 = vadd.f32 %v405, %v418
    %v421 = vpack.c.bf16 %v420, %v420
    %v423 = vrot.slane %v421, 1
    %424 = vrot.lane.b32.xlu0 %v423, 96
    %v425 = vpop.permute.xlu0 %424
    %v427 = vsel %vm258, %v425, 0
    %429 = vmatprep.subr.bf16.mxu0 0
    %430 = vmatpush1.bf16.msra.mxu0 0
    %431 = vmatprep.subr.bf16.mxu0 0
    %432 = vmatpush1.bf16.msra.mxu0 0
    %433 = vmatprep.subr.bf16.mxu0 0
    %434 = vmatpush1.bf16.msra.mxu0 0
    %435 = vmatprep.subr.bf16.mxu0 0
    %436 = vmatpush1.bf16.msra.mxu0 0
    %437 = vmatprep.subr.bf16.mxu0 0
    %438 = vmatpush1.bf16.msra.mxu0 0
    %439 = vmatprep.subr.bf16.mxu0 0
    %440 = vmatpush1.bf16.msra.mxu0 0
    %441 = vmatprep.subr.bf16.mxu0 0
    %442 = vmatpush1.bf16.msra.mxu0 0
    %443 = vmatprep.subr.bf16.mxu0 0
    %444 = vmatpush1.bf16.msra.mxu0 %v256
    %445 = vmatprep.subr.bf16.mxu0 0
    %446 = vmatpush2.bf16.msra.mxu0 0
    %447 = vmatprep.subr.bf16.mxu0 0
    %448 = vmatpush2.bf16.msra.mxu0 0
    %449 = vmatprep.subr.bf16.mxu0 0
    %450 = vmatpush2.bf16.msra.mxu0 0
    %451 = vmatprep.subr.bf16.mxu0 0
    %452 = vmatpush2.bf16.msra.mxu0 0
    %453 = vmatprep.subr.bf16.mxu0 0
    %454 = vmatpush2.bf16.msra.mxu0 0
    %455 = vmatprep.subr.bf16.mxu0 0
    %456 = vmatpush2.bf16.msra.mxu0 0
    %457 = vmatprep.subr.bf16.mxu0 0
    %458 = vmatpush2.bf16.msra.mxu0 0
    %459 = vmatprep.subr.bf16.mxu0 0
    %460 = vmatpush2.bf16.msra.mxu0 0
    %461 = vmatprep.mubr.bf16.mxu0 0
    %462 = vmatmul.mubr.bf16.gmra.mxu0 %v427
    %v463 = vpop.f32.mrf.mxu0
    %v464 = vadd.f32 %v161, %v463
    %v465 = vpop.f32.mrf.mxu0
    %v466 = vpop.f32.mrf.mxu0
    %v467 = vpop.f32.mrf.mxu0
    %468 = vdwg.mxu0
    %469 = vrot.lane.b32.xlu0 %v381, 80
    %v470 = vpop.permute.xlu0 %469
    %v472 = vadd.f32 %v464, %v470
    %v473 = vxor.u32 %v472, 2147483648
    %v474 = vmul.f32 %v473, 1.442695
    %v475 = vpow.pop %v474
    %v476 = vadd.f32 %v475, 1.0
    %v477 = vrcp.pop %v476
    %v478 = vmul.f32 1.0, %v477
    %479 = vrot.lane.b32.xlu0 %v381, 48
    %v480 = vpop.permute.xlu0 %479
    %v482 = vmul.f32 %v478, %v480
    %484 = vrot.lane.b32.xlu0 %v482, 32
    %v485 = vpop.permute.xlu0 %484
    %v487 = vadd.f32 %v464, %v485
    %v488 = vtanh.pop %v487
    %v489 = vsub.f32 %v332, %v488
    %491 = vrot.lane.b32.xlu0 %v489, 112
    %v492 = vpop.permute.xlu0 %491
    %v494 = vmul.f32 %v478, %v492
    %496 = vrot.lane.b32.xlu0 %v494, 16
    %v497 = vpop.permute.xlu0 %496
    %v499 = vadd.f32 %v488, %v497
    %501 = vrot.lane.b32.xlu0 %v420, 96
    %v502 = vpop.permute.xlu0 %501
    %v505 = vrot.slane %v499, 6
    %506 = vrot.lane.b32.xlu0 %v505, 112
    %v507 = vpop.permute.xlu0 %506
    %v509 = vsel %vm258, %v502, %v507
    %v510 = vpack.c.bf16 %v509, %v509
    %v512 = vrot.slane %v510, 1
    %v514 = vsel %vm98, %v512, 0
    %516 = vmatprep.subr.bf16.mxu0 0
    %517 = vmatpush1.bf16.msra.mxu0 0
    %518 = vmatprep.subr.bf16.mxu0 0
    %519 = vmatpush1.bf16.msra.mxu0 0
    %520 = vmatprep.subr.bf16.mxu0 0
    %521 = vmatpush1.bf16.msra.mxu0 0
    %522 = vmatprep.subr.bf16.mxu0 0
    %523 = vmatpush1.bf16.msra.mxu0 0
    %524 = vmatprep.subr.bf16.mxu0 0
    %525 = vmatpush1.bf16.msra.mxu0 0
    %526 = vmatprep.subr.bf16.mxu0 0
    %527 = vmatpush1.bf16.msra.mxu0 0
    %528 = vmatprep.subr.bf16.mxu0 0
    %529 = vmatpush1.bf16.msra.mxu0 %v173
    %530 = vmatprep.subr.bf16.mxu0 0
    %531 = vmatpush1.bf16.msra.mxu0 %v172
    %532 = vmatprep.subr.bf16.mxu0 0
    %533 = vmatpush2.bf16.msra.mxu0 0
    %534 = vmatprep.subr.bf16.mxu0 0
    %535 = vmatpush2.bf16.msra.mxu0 0
    %536 = vmatprep.subr.bf16.mxu0 0
    %537 = vmatpush2.bf16.msra.mxu0 0
    %538 = vmatprep.subr.bf16.mxu0 0
    %539 = vmatpush2.bf16.msra.mxu0 0
    %540 = vmatprep.subr.bf16.mxu0 0
    %541 = vmatpush2.bf16.msra.mxu0 0
    %542 = vmatprep.subr.bf16.mxu0 0
    %543 = vmatpush2.bf16.msra.mxu0 0
    %544 = vmatprep.subr.bf16.mxu0 0
    %545 = vmatpush2.bf16.msra.mxu0 0
    %546 = vmatprep.subr.bf16.mxu0 0
    %547 = vmatpush2.bf16.msra.mxu0 0
    %548 = vmatprep.mubr.bf16.mxu0 0
    %549 = vmatmul.mubr.bf16.gmra.mxu0 %v514
    %v550 = vpop.f32.mrf.mxu0
    %v551 = vadd.f32 %v154, %v550
    %v552 = vpop.f32.mrf.mxu0
    %v553 = vpop.f32.mrf.mxu0
    %v554 = vpop.f32.mrf.mxu0
    %555 = vdwg.mxu0
    %v557 = vrot.slane %v551, 4
    %v559 = vadd.f32 %v137, %v557
    %v560 = vxor.u32 %v559, 2147483648
    %v561 = vmul.f32 %v560, 1.442695
    %v562 = vpow.pop %v561
    %v563 = vadd.f32 %v562, 1.0
    %v564 = vrcp.pop %v563
    %v565 = vmul.f32 1.0, %v564
    %566 = vrot.lane.b32.xlu0 %v557, 96
    %v567 = vpop.permute.xlu0 %566
    %v569 = vmul.f32 %v565, %v567
    %571 = vrot.lane.b32.xlu0 %v569, 32
    %v572 = vpop.permute.xlu0 %571
    %v574 = vadd.f32 %v137, %v572
    %v575 = vtanh.pop %v574
    %v577 = vrot.slane %v575, 2
    %v579 = vsub.f32 %v420, %v577
    %v581 = vrot.slane %v579, 6
    %582 = vrot.lane.b32.xlu0 %v581, 112
    %v583 = vpop.permute.xlu0 %582
    %v585 = vmul.f32 %v565, %v583
    %587 = vrot.lane.b32.xlu0 %v585, 16
    %v588 = vpop.permute.xlu0 %587
    %v590 = vadd.f32 %v575, %v588
    %v591 = vpack.c.bf16 %v590, %v590
    %v593 = vrot.slane %v591, 2
    %594 = vrot.lane.b32.xlu0 %v593, 96
    %v595 = vpop.permute.xlu0 %594
    %v597 = vsel %vm258, %v595, 0
    %599 = vmatprep.subr.bf16.mxu0 0
    %600 = vmatpush1.bf16.msra.mxu0 0
    %601 = vmatprep.subr.bf16.mxu0 0
    %602 = vmatpush1.bf16.msra.mxu0 0
    %603 = vmatprep.subr.bf16.mxu0 0
    %604 = vmatpush1.bf16.msra.mxu0 0
    %605 = vmatprep.subr.bf16.mxu0 0
    %606 = vmatpush1.bf16.msra.mxu0 0
    %607 = vmatprep.subr.bf16.mxu0 0
    %608 = vmatpush1.bf16.msra.mxu0 0
    %609 = vmatprep.subr.bf16.mxu0 0
    %610 = vmatpush1.bf16.msra.mxu0 0
    %611 = vmatprep.subr.bf16.mxu0 0
    %612 = vmatpush1.bf16.msra.mxu0 0
    %613 = vmatprep.subr.bf16.mxu0 0
    %614 = vmatpush1.bf16.msra.mxu0 %v256
    %615 = vmatprep.subr.bf16.mxu0 0
    %616 = vmatpush2.bf16.msra.mxu0 0
    %617 = vmatprep.subr.bf16.mxu0 0
    %618 = vmatpush2.bf16.msra.mxu0 0
    %619 = vmatprep.subr.bf16.mxu0 0
    %620 = vmatpush2.bf16.msra.mxu0 0
    %621 = vmatprep.subr.bf16.mxu0 0
    %622 = vmatpush2.bf16.msra.mxu0 0
    %623 = vmatprep.subr.bf16.mxu0 0
    %624 = vmatpush2.bf16.msra.mxu0 0
    %625 = vmatprep.subr.bf16.mxu0 0
    %626 = vmatpush2.bf16.msra.mxu0 0
    %627 = vmatprep.subr.bf16.mxu0 0
    %628 = vmatpush2.bf16.msra.mxu0 0
    %629 = vmatprep.subr.bf16.mxu0 0
    %630 = vmatpush2.bf16.msra.mxu0 0
    %631 = vmatprep.mubr.bf16.mxu0 0
    %632 = vmatmul.mubr.bf16.gmra.mxu0 %v597
    %v633 = vpop.f32.mrf.mxu0
    %v634 = vadd.f32 %v161, %v633
    %v635 = vpop.f32.mrf.mxu0
    %v636 = vpop.f32.mrf.mxu0
    %v637 = vpop.f32.mrf.mxu0
    %638 = vdwg.mxu0
    %639 = vrot.lane.b32.xlu0 %v551, 80
    %v640 = vpop.permute.xlu0 %639
    %v642 = vadd.f32 %v634, %v640
    %v643 = vxor.u32 %v642, 2147483648
    %v644 = vmul.f32 %v643, 1.442695
    %v645 = vpow.pop %v644
    %v646 = vadd.f32 %v645, 1.0
    %v647 = vrcp.pop %v646
    %v648 = vmul.f32 1.0, %v647
    %649 = vrot.lane.b32.xlu0 %v551, 48
    %v650 = vpop.permute.xlu0 %649
    %v652 = vmul.f32 %v648, %v650
    %654 = vrot.lane.b32.xlu0 %v652, 32
    %v655 = vpop.permute.xlu0 %654
    %v657 = vadd.f32 %v634, %v655
    %v658 = vtanh.pop %v657
    %v659 = vsub.f32 %v499, %v658
    %661 = vrot.lane.b32.xlu0 %v659, 112
    %v662 = vpop.permute.xlu0 %661
    %v664 = vmul.f32 %v648, %v662
    %666 = vrot.lane.b32.xlu0 %v664, 16
    %v667 = vpop.permute.xlu0 %666
    %v669 = vadd.f32 %v658, %v667
    %671 = vrot.lane.b32.xlu0 %v590, 96
    %v672 = vpop.permute.xlu0 %671
    %v675 = vrot.slane %v669, 4
    %676 = vrot.lane.b32.xlu0 %v675, 112
    %v677 = vpop.permute.xlu0 %676
    %v679 = vsel %vm258, %v672, %v677
    %v680 = vpack.c.bf16 %v679, %v679
    %v682 = vrot.slane %v680, 2
    %v684 = vsel %vm98, %v682, 0
    %686 = vmatprep.subr.bf16.mxu0 0
    %687 = vmatpush1.bf16.msra.mxu0 0
    %688 = vmatprep.subr.bf16.mxu0 0
    %689 = vmatpush1.bf16.msra.mxu0 0
    %690 = vmatprep.subr.bf16.mxu0 0
    %691 = vmatpush1.bf16.msra.mxu0 0
    %692 = vmatprep.subr.bf16.mxu0 0
    %693 = vmatpush1.bf16.msra.mxu0 0
    %694 = vmatprep.subr.bf16.mxu0 0
    %695 = vmatpush1.bf16.msra.mxu0 0
    %696 = vmatprep.subr.bf16.mxu0 0
    %697 = vmatpush1.bf16.msra.mxu0 0
    %698 = vmatprep.subr.bf16.mxu0 0
    %699 = vmatpush1.bf16.msra.mxu0 %v173
    %700 = vmatprep.subr.bf16.mxu0 0
    %701 = vmatpush1.bf16.msra.mxu0 %v172
    %702 = vmatprep.subr.bf16.mxu0 0
    %703 = vmatpush2.bf16.msra.mxu0 0
    %704 = vmatprep.subr.bf16.mxu0 0
    %705 = vmatpush2.bf16.msra.mxu0 0
    %706 = vmatprep.subr.bf16.mxu0 0
    %707 = vmatpush2.bf16.msra.mxu0 0
    %708 = vmatprep.subr.bf16.mxu0 0
    %709 = vmatpush2.bf16.msra.mxu0 0
    %710 = vmatprep.subr.bf16.mxu0 0
    %711 = vmatpush2.bf16.msra.mxu0 0
    %712 = vmatprep.subr.bf16.mxu0 0
    %713 = vmatpush2.bf16.msra.mxu0 0
    %714 = vmatprep.subr.bf16.mxu0 0
    %715 = vmatpush2.bf16.msra.mxu0 0
    %716 = vmatprep.subr.bf16.mxu0 0
    %717 = vmatpush2.bf16.msra.mxu0 0
    %718 = vmatprep.mubr.bf16.mxu0 0
    %719 = vmatmul.mubr.bf16.gmra.mxu0 %v684
    %v720 = vpop.f32.mrf.mxu0
    %v721 = vadd.f32 %v154, %v720
    %v722 = vpop.f32.mrf.mxu0
    %v723 = vpop.f32.mrf.mxu0
    %v724 = vpop.f32.mrf.mxu0
    %725 = vdwg.mxu0
    %v727 = vrot.slane %v721, 2
    %v729 = vadd.f32 %v137, %v727
    %v730 = vxor.u32 %v729, 2147483648
    %v731 = vmul.f32 %v730, 1.442695
    %v732 = vpow.pop %v731
    %v733 = vadd.f32 %v732, 1.0
    %v734 = vrcp.pop %v733
    %v735 = vmul.f32 1.0, %v734
    %736 = vrot.lane.b32.xlu0 %v727, 96
    %v737 = vpop.permute.xlu0 %736
    %v739 = vmul.f32 %v735, %v737
    %741 = vrot.lane.b32.xlu0 %v739, 32
    %v742 = vpop.permute.xlu0 %741
    %v744 = vadd.f32 %v137, %v742
    %v745 = vtanh.pop %v744
    %v747 = vrot.slane %v745, 2
    %v749 = vsub.f32 %v590, %v747
    %v751 = vrot.slane %v749, 6
    %752 = vrot.lane.b32.xlu0 %v751, 112
    %v753 = vpop.permute.xlu0 %752
    %v755 = vmul.f32 %v735, %v753
    %757 = vrot.lane.b32.xlu0 %v755, 16
    %v758 = vpop.permute.xlu0 %757
    %v760 = vadd.f32 %v745, %v758
    %v761 = vpack.c.bf16 %v760, %v760
    %v763 = vrot.slane %v761, 3
    %764 = vrot.lane.b32.xlu0 %v763, 96
    %v765 = vpop.permute.xlu0 %764
    %v767 = vsel %vm258, %v765, 0
    %769 = vmatprep.subr.bf16.mxu0 0
    %770 = vmatpush1.bf16.msra.mxu0 0
    %771 = vmatprep.subr.bf16.mxu0 0
    %772 = vmatpush1.bf16.msra.mxu0 0
    %773 = vmatprep.subr.bf16.mxu0 0
    %774 = vmatpush1.bf16.msra.mxu0 0
    %775 = vmatprep.subr.bf16.mxu0 0
    %776 = vmatpush1.bf16.msra.mxu0 0
    %777 = vmatprep.subr.bf16.mxu0 0
    %778 = vmatpush1.bf16.msra.mxu0 0
    %779 = vmatprep.subr.bf16.mxu0 0
    %780 = vmatpush1.bf16.msra.mxu0 0
    %781 = vmatprep.subr.bf16.mxu0 0
    %782 = vmatpush1.bf16.msra.mxu0 0
    %783 = vmatprep.subr.bf16.mxu0 0
    %784 = vmatpush1.bf16.msra.mxu0 %v256
    %785 = vmatprep.subr.bf16.mxu0 0
    %786 = vmatpush2.bf16.msra.mxu0 0
    %787 = vmatprep.subr.bf16.mxu0 0
    %788 = vmatpush2.bf16.msra.mxu0 0
    %789 = vmatprep.subr.bf16.mxu0 0
    %790 = vmatpush2.bf16.msra.mxu0 0
    %791 = vmatprep.subr.bf16.mxu0 0
    %792 = vmatpush2.bf16.msra.mxu0 0
    %793 = vmatprep.subr.bf16.mxu0 0
    %794 = vmatpush2.bf16.msra.mxu0 0
    %795 = vmatprep.subr.bf16.mxu0 0
    %796 = vmatpush2.bf16.msra.mxu0 0
    %797 = vmatprep.subr.bf16.mxu0 0
    %798 = vmatpush2.bf16.msra.mxu0 0
    %799 = vmatprep.subr.bf16.mxu0 0
    %800 = vmatpush2.bf16.msra.mxu0 0
    %801 = vmatprep.mubr.bf16.mxu0 0
    %802 = vmatmul.mubr.bf16.gmra.mxu0 %v767
    %v803 = vpop.f32.mrf.mxu0
    %v804 = vadd.f32 %v161, %v803
    %v805 = vpop.f32.mrf.mxu0
    %v806 = vpop.f32.mrf.mxu0
    %v807 = vpop.f32.mrf.mxu0
    %808 = vdwg.mxu0
    %809 = vrot.lane.b32.xlu0 %v721, 80
    %v810 = vpop.permute.xlu0 %809
    %v812 = vadd.f32 %v804, %v810
    %v813 = vxor.u32 %v812, 2147483648
    %v814 = vmul.f32 %v813, 1.442695
    %v815 = vpow.pop %v814
    %v816 = vadd.f32 %v815, 1.0
    %v817 = vrcp.pop %v816
    %v818 = vmul.f32 1.0, %v817
    %819 = vrot.lane.b32.xlu0 %v721, 48
    %v820 = vpop.permute.xlu0 %819
    %v822 = vmul.f32 %v818, %v820
    %824 = vrot.lane.b32.xlu0 %v822, 32
    %v825 = vpop.permute.xlu0 %824
    %v827 = vadd.f32 %v804, %v825
    %v828 = vtanh.pop %v827
    %v829 = vsub.f32 %v669, %v828
    %831 = vrot.lane.b32.xlu0 %v829, 112
    %v832 = vpop.permute.xlu0 %831
    %v834 = vmul.f32 %v818, %v832
    %836 = vrot.lane.b32.xlu0 %v834, 16
    %v837 = vpop.permute.xlu0 %836
    %v839 = vadd.f32 %v828, %v837
    %841 = vrot.lane.b32.xlu0 %v760, 96
    %v842 = vpop.permute.xlu0 %841
    %v845 = vrot.slane %v839, 2
    %846 = vrot.lane.b32.xlu0 %v845, 112
    %v847 = vpop.permute.xlu0 %846
    %v849 = vsel %vm258, %v842, %v847
    %v850 = vpack.c.bf16 %v849, %v849
    %v852 = vrot.slane %v850, 3
    %v854 = vsel %vm98, %v852, 0
    %856 = vmatprep.subr.bf16.mxu0 0
    %857 = vmatpush1.bf16.msra.mxu0 0
    %858 = vmatprep.subr.bf16.mxu0 0
    %859 = vmatpush1.bf16.msra.mxu0 0
    %860 = vmatprep.subr.bf16.mxu0 0
    %861 = vmatpush1.bf16.msra.mxu0 0
    %862 = vmatprep.subr.bf16.mxu0 0
    %863 = vmatpush1.bf16.msra.mxu0 0
    %864 = vmatprep.subr.bf16.mxu0 0
    %865 = vmatpush1.bf16.msra.mxu0 0
    %866 = vmatprep.subr.bf16.mxu0 0
    %867 = vmatpush1.bf16.msra.mxu0 0
    %868 = vmatprep.subr.bf16.mxu0 0
    %869 = vmatpush1.bf16.msra.mxu0 %v173
    %870 = vmatprep.subr.bf16.mxu0 0
    %871 = vmatpush1.bf16.msra.mxu0 %v172
    %872 = vmatprep.subr.bf16.mxu0 0
    %873 = vmatpush2.bf16.msra.mxu0 0
    %874 = vmatprep.subr.bf16.mxu0 0
    %875 = vmatpush2.bf16.msra.mxu0 0
    %876 = vmatprep.subr.bf16.mxu0 0
    %877 = vmatpush2.bf16.msra.mxu0 0
    %878 = vmatprep.subr.bf16.mxu0 0
    %879 = vmatpush2.bf16.msra.mxu0 0
    %880 = vmatprep.subr.bf16.mxu0 0
    %881 = vmatpush2.bf16.msra.mxu0 0
    %882 = vmatprep.subr.bf16.mxu0 0
    %883 = vmatpush2.bf16.msra.mxu0 0
    %884 = vmatprep.subr.bf16.mxu0 0
    %885 = vmatpush2.bf16.msra.mxu0 0
    %886 = vmatprep.subr.bf16.mxu0 0
    %887 = vmatpush2.bf16.msra.mxu0 0
    %888 = vmatprep.mubr.bf16.mxu0 0
    %889 = vmatmul.mubr.bf16.gmra.mxu0 %v854
    %v890 = vpop.f32.mrf.mxu0
    %v891 = vadd.f32 %v154, %v890
    %v892 = vpop.f32.mrf.mxu0
    %v893 = vpop.f32.mrf.mxu0
    %v894 = vpop.f32.mrf.mxu0
    %895 = vdwg.mxu0
    %v896 = vadd.f32 %v140, %v891
    %v897 = vxor.u32 %v896, 2147483648
    %v898 = vmul.f32 %v897, 1.442695
    %v899 = vpow.pop %v898
    %v900 = vadd.f32 %v899, 1.0
    %v901 = vrcp.pop %v900
    %v902 = vmul.f32 1.0, %v901
    %904 = vrot.lane.b32.xlu0 %v891, 96
    %v905 = vpop.permute.xlu0 %904
    %v907 = vmul.f32 %v902, %v905
    %909 = vrot.lane.b32.xlu0 %v907, 32
    %v910 = vpop.permute.xlu0 %909
    %v912 = vadd.f32 %v140, %v910
    %v913 = vtanh.pop %v912
    %v915 = vrot.slane %v913, 2
    %v917 = vsub.f32 %v760, %v915
    %v919 = vrot.slane %v917, 6
    %920 = vrot.lane.b32.xlu0 %v919, 112
    %v921 = vpop.permute.xlu0 %920
    %v923 = vmul.f32 %v902, %v921
    %925 = vrot.lane.b32.xlu0 %v923, 16
    %v926 = vpop.permute.xlu0 %925
    %v928 = vadd.f32 %v913, %v926
    %v929 = vpack.c.bf16 %v928, %v928
    %931 = vrot.lane.b32.xlu0 %v929, 96
    %v932 = vpop.permute.xlu0 %931
    %v934 = vsel %vm258, %v932, 0
    %936 = vmatprep.subr.bf16.mxu0 0
    %937 = vmatpush1.bf16.msra.mxu0 0
    %938 = vmatprep.subr.bf16.mxu0 0
    %939 = vmatpush1.bf16.msra.mxu0 0
    %940 = vmatprep.subr.bf16.mxu0 0
    %941 = vmatpush1.bf16.msra.mxu0 0
    %942 = vmatprep.subr.bf16.mxu0 0
    %943 = vmatpush1.bf16.msra.mxu0 0
    %944 = vmatprep.subr.bf16.mxu0 0
    %945 = vmatpush1.bf16.msra.mxu0 0
    %946 = vmatprep.subr.bf16.mxu0 0
    %947 = vmatpush1.bf16.msra.mxu0 0
    %948 = vmatprep.subr.bf16.mxu0 0
    %949 = vmatpush1.bf16.msra.mxu0 0
    %950 = vmatprep.subr.bf16.mxu0 0
    %951 = vmatpush1.bf16.msra.mxu0 %v256
    %952 = vmatprep.subr.bf16.mxu0 0
    %953 = vmatpush2.bf16.msra.mxu0 0
    %954 = vmatprep.subr.bf16.mxu0 0
    %955 = vmatpush2.bf16.msra.mxu0 0
    %956 = vmatprep.subr.bf16.mxu0 0
    %957 = vmatpush2.bf16.msra.mxu0 0
    %958 = vmatprep.subr.bf16.mxu0 0
    %959 = vmatpush2.bf16.msra.mxu0 0
    %960 = vmatprep.subr.bf16.mxu0 0
    %961 = vmatpush2.bf16.msra.mxu0 0
    %962 = vmatprep.subr.bf16.mxu0 0
    %963 = vmatpush2.bf16.msra.mxu0 0
    %964 = vmatprep.subr.bf16.mxu0 0
    %965 = vmatpush2.bf16.msra.mxu0 0
    %966 = vmatprep.subr.bf16.mxu0 0
    %967 = vmatpush2.bf16.msra.mxu0 0
    %968 = vmatprep.mubr.bf16.mxu0 0
    %969 = vmatmul.mubr.bf16.gmra.mxu0 %v934
    %v970 = vpop.f32.mrf.mxu0
    %v971 = vadd.f32 %v161, %v970
    %v972 = vpop.f32.mrf.mxu0
    %v973 = vpop.f32.mrf.mxu0
    %v974 = vpop.f32.mrf.mxu0
    %975 = vdwg.mxu0
    %976 = vrot.lane.b32.xlu0 %v891, 80
    %v977 = vpop.permute.xlu0 %976
    %v979 = vadd.f32 %v971, %v977
    %v980 = vxor.u32 %v979, 2147483648
    %v981 = vmul.f32 %v980, 1.442695
    %v982 = vpow.pop %v981
    %v983 = vadd.f32 %v982, 1.0
    %v984 = vrcp.pop %v983
    %v985 = vmul.f32 1.0, %v984
    %986 = vrot.lane.b32.xlu0 %v891, 48
    %v987 = vpop.permute.xlu0 %986
    %v989 = vmul.f32 %v985, %v987
    %991 = vrot.lane.b32.xlu0 %v989, 32
    %v992 = vpop.permute.xlu0 %991
    %v994 = vadd.f32 %v971, %v992
    %v995 = vtanh.pop %v994
    %v996 = vsub.f32 %v839, %v995
    %998 = vrot.lane.b32.xlu0 %v996, 112
    %v999 = vpop.permute.xlu0 %998
    %v1001 = vmul.f32 %v985, %v999
    %1003 = vrot.lane.b32.xlu0 %v1001, 16
    %v1004 = vpop.permute.xlu0 %1003
    %v1006 = vadd.f32 %v995, %v1004
    %1008 = vrot.lane.b32.xlu0 %v928, 96
    %v1009 = vpop.permute.xlu0 %1008
    %1012 = vrot.lane.b32.xlu0 %v1006, 112
    %v1013 = vpop.permute.xlu0 %1012
    %v1015 = vsel %vm258, %v1009, %v1013
    %v1016 = vpack.c.bf16 %v1015, %v1015
    %v1018 = vsel %vm98, %v1016, 0
    %1020 = vmatprep.subr.bf16.mxu0 0
    %1021 = vmatpush1.bf16.msra.mxu0 0
    %1022 = vmatprep.subr.bf16.mxu0 0
    %1023 = vmatpush1.bf16.msra.mxu0 0
    %1024 = vmatprep.subr.bf16.mxu0 0
    %1025 = vmatpush1.bf16.msra.mxu0 0
    %1026 = vmatprep.subr.bf16.mxu0 0
    %1027 = vmatpush1.bf16.msra.mxu0 0
    %1028 = vmatprep.subr.bf16.mxu0 0
    %1029 = vmatpush1.bf16.msra.mxu0 0
    %1030 = vmatprep.subr.bf16.mxu0 0
    %1031 = vmatpush1.bf16.msra.mxu0 0
    %1032 = vmatprep.subr.bf16.mxu0 0
    %1033 = vmatpush1.bf16.msra.mxu0 %v173
    %1034 = vmatprep.subr.bf16.mxu0 0
    %1035 = vmatpush1.bf16.msra.mxu0 %v172
    %1036 = vmatprep.subr.bf16.mxu0 0
    %1037 = vmatpush2.bf16.msra.mxu0 0
    %1038 = vmatprep.subr.bf16.mxu0 0
    %1039 = vmatpush2.bf16.msra.mxu0 0
    %1040 = vmatprep.subr.bf16.mxu0 0
    %1041 = vmatpush2.bf16.msra.mxu0 0
    %1042 = vmatprep.subr.bf16.mxu0 0
    %1043 = vmatpush2.bf16.msra.mxu0 0
    %1044 = vmatprep.subr.bf16.mxu0 0
    %1045 = vmatpush2.bf16.msra.mxu0 0
    %1046 = vmatprep.subr.bf16.mxu0 0
    %1047 = vmatpush2.bf16.msra.mxu0 0
    %1048 = vmatprep.subr.bf16.mxu0 0
    %1049 = vmatpush2.bf16.msra.mxu0 0
    %1050 = vmatprep.subr.bf16.mxu0 0
    %1051 = vmatpush2.bf16.msra.mxu0 0
    %1052 = vmatprep.mubr.bf16.mxu0 0
    %1053 = vmatmul.mubr.bf16.gmra.mxu0 %v1018
    %v1054 = vpop.f32.mrf.mxu0
    %v1055 = vadd.f32 %v154, %v1054
    %v1056 = vpop.f32.mrf.mxu0
    %v1057 = vpop.f32.mrf.mxu0
    %v1058 = vpop.f32.mrf.mxu0
    %1059 = vdwg.mxu0
    %v1061 = vrot.slane %v1055, 6
    %v1063 = vadd.f32 %v140, %v1061
    %v1064 = vxor.u32 %v1063, 2147483648
    %v1065 = vmul.f32 %v1064, 1.442695
    %v1066 = vpow.pop %v1065
    %v1067 = vadd.f32 %v1066, 1.0
    %v1068 = vrcp.pop %v1067
    %v1069 = vmul.f32 1.0, %v1068
    %1070 = vrot.lane.b32.xlu0 %v1061, 96
    %v1071 = vpop.permute.xlu0 %1070
    %v1073 = vmul.f32 %v1069, %v1071
    %1075 = vrot.lane.b32.xlu0 %v1073, 32
    %v1076 = vpop.permute.xlu0 %1075
    %v1078 = vadd.f32 %v140, %v1076
    %v1079 = vtanh.pop %v1078
    %v1081 = vrot.slane %v1079, 2
    %v1083 = vsub.f32 %v928, %v1081
    %v1085 = vrot.slane %v1083, 6
    %1086 = vrot.lane.b32.xlu0 %v1085, 112
    %v1087 = vpop.permute.xlu0 %1086
    %v1089 = vmul.f32 %v1069, %v1087
    %1091 = vrot.lane.b32.xlu0 %v1089, 16
    %v1092 = vpop.permute.xlu0 %1091
    %v1094 = vadd.f32 %v1079, %v1092
    %v1095 = vpack.c.bf16 %v1094, %v1094
    %v1097 = vrot.slane %v1095, 1
    %1098 = vrot.lane.b32.xlu0 %v1097, 96
    %v1099 = vpop.permute.xlu0 %1098
    %v1101 = vsel %vm258, %v1099, 0
    %1103 = vmatprep.subr.bf16.mxu0 0
    %1104 = vmatpush1.bf16.msra.mxu0 0
    %1105 = vmatprep.subr.bf16.mxu0 0
    %1106 = vmatpush1.bf16.msra.mxu0 0
    %1107 = vmatprep.subr.bf16.mxu0 0
    %1108 = vmatpush1.bf16.msra.mxu0 0
    %1109 = vmatprep.subr.bf16.mxu0 0
    %1110 = vmatpush1.bf16.msra.mxu0 0
    %1111 = vmatprep.subr.bf16.mxu0 0
    %1112 = vmatpush1.bf16.msra.mxu0 0
    %1113 = vmatprep.subr.bf16.mxu0 0
    %1114 = vmatpush1.bf16.msra.mxu0 0
    %1115 = vmatprep.subr.bf16.mxu0 0
    %1116 = vmatpush1.bf16.msra.mxu0 0
    %1117 = vmatprep.subr.bf16.mxu0 0
    %1118 = vmatpush1.bf16.msra.mxu0 %v256
    %1119 = vmatprep.subr.bf16.mxu0 0
    %1120 = vmatpush2.bf16.msra.mxu0 0
    %1121 = vmatprep.subr.bf16.mxu0 0
    %1122 = vmatpush2.bf16.msra.mxu0 0
    %1123 = vmatprep.subr.bf16.mxu0 0
    %1124 = vmatpush2.bf16.msra.mxu0 0
    %1125 = vmatprep.subr.bf16.mxu0 0
    %1126 = vmatpush2.bf16.msra.mxu0 0
    %1127 = vmatprep.subr.bf16.mxu0 0
    %1128 = vmatpush2.bf16.msra.mxu0 0
    %1129 = vmatprep.subr.bf16.mxu0 0
    %1130 = vmatpush2.bf16.msra.mxu0 0
    %1131 = vmatprep.subr.bf16.mxu0 0
    %1132 = vmatpush2.bf16.msra.mxu0 0
    %1133 = vmatprep.subr.bf16.mxu0 0
    %1134 = vmatpush2.bf16.msra.mxu0 0
    %1135 = vmatprep.mubr.bf16.mxu0 0
    %1136 = vmatmul.mubr.bf16.gmra.mxu0 %v1101
    %v1137 = vpop.f32.mrf.mxu0
    %v1138 = vadd.f32 %v161, %v1137
    %v1139 = vpop.f32.mrf.mxu0
    %v1140 = vpop.f32.mrf.mxu0
    %v1141 = vpop.f32.mrf.mxu0
    %1142 = vdwg.mxu0
    %1143 = vrot.lane.b32.xlu0 %v1055, 80
    %v1144 = vpop.permute.xlu0 %1143
    %v1146 = vadd.f32 %v1138, %v1144
    %v1147 = vxor.u32 %v1146, 2147483648
    %v1148 = vmul.f32 %v1147, 1.442695
    %v1149 = vpow.pop %v1148
    %v1150 = vadd.f32 %v1149, 1.0
    %v1151 = vrcp.pop %v1150
    %v1152 = vmul.f32 1.0, %v1151
    %1153 = vrot.lane.b32.xlu0 %v1055, 48
    %v1154 = vpop.permute.xlu0 %1153
    %v1156 = vmul.f32 %v1152, %v1154
    %1158 = vrot.lane.b32.xlu0 %v1156, 32
    %v1159 = vpop.permute.xlu0 %1158
    %v1161 = vadd.f32 %v1138, %v1159
    %v1162 = vtanh.pop %v1161
    %v1163 = vsub.f32 %v1006, %v1162
    %1165 = vrot.lane.b32.xlu0 %v1163, 112
    %v1166 = vpop.permute.xlu0 %1165
    %v1168 = vmul.f32 %v1152, %v1166
    %1170 = vrot.lane.b32.xlu0 %v1168, 16
    %v1171 = vpop.permute.xlu0 %1170
    %v1173 = vadd.f32 %v1162, %v1171
    %1175 = vrot.lane.b32.xlu0 %v1094, 96
    %v1176 = vpop.permute.xlu0 %1175
    %v1179 = vrot.slane %v1173, 6
    %1180 = vrot.lane.b32.xlu0 %v1179, 112
    %v1181 = vpop.permute.xlu0 %1180
    %v1183 = vsel %vm258, %v1176, %v1181
    %v1184 = vpack.c.bf16 %v1183, %v1183
    %v1186 = vrot.slane %v1184, 1
    %v1188 = vsel %vm98, %v1186, 0
    %1190 = vmatprep.subr.bf16.mxu0 0
    %1191 = vmatpush1.bf16.msra.mxu0 0
    %1192 = vmatprep.subr.bf16.mxu0 0
    %1193 = vmatpush1.bf16.msra.mxu0 0
    %1194 = vmatprep.subr.bf16.mxu0 0
    %1195 = vmatpush1.bf16.msra.mxu0 0
    %1196 = vmatprep.subr.bf16.mxu0 0
    %1197 = vmatpush1.bf16.msra.mxu0 0
    %1198 = vmatprep.subr.bf16.mxu0 0
    %1199 = vmatpush1.bf16.msra.mxu0 0
    %1200 = vmatprep.subr.bf16.mxu0 0
    %1201 = vmatpush1.bf16.msra.mxu0 0
    %1202 = vmatprep.subr.bf16.mxu0 0
    %1203 = vmatpush1.bf16.msra.mxu0 %v173
    %1204 = vmatprep.subr.bf16.mxu0 0
    %1205 = vmatpush1.bf16.msra.mxu0 %v172
    %1206 = vmatprep.subr.bf16.mxu0 0
    %1207 = vmatpush2.bf16.msra.mxu0 0
    %1208 = vmatprep.subr.bf16.mxu0 0
    %1209 = vmatpush2.bf16.msra.mxu0 0
    %1210 = vmatprep.subr.bf16.mxu0 0
    %1211 = vmatpush2.bf16.msra.mxu0 0
    %1212 = vmatprep.subr.bf16.mxu0 0
    %1213 = vmatpush2.bf16.msra.mxu0 0
    %1214 = vmatprep.subr.bf16.mxu0 0
    %1215 = vmatpush2.bf16.msra.mxu0 0
    %1216 = vmatprep.subr.bf16.mxu0 0
    %1217 = vmatpush2.bf16.msra.mxu0 0
    %1218 = vmatprep.subr.bf16.mxu0 0
    %1219 = vmatpush2.bf16.msra.mxu0 0
    %1220 = vmatprep.subr.bf16.mxu0 0
    %1221 = vmatpush2.bf16.msra.mxu0 0
    %1222 = vmatprep.mubr.bf16.mxu0 0
    %1223 = vmatmul.mubr.bf16.gmra.mxu0 %v1188
    %v1224 = vpop.f32.mrf.mxu0
    %v1225 = vadd.f32 %v154, %v1224
    %v1226 = vpop.f32.mrf.mxu0
    %v1227 = vpop.f32.mrf.mxu0
    %v1228 = vpop.f32.mrf.mxu0
    %1229 = vdwg.mxu0
    %v1231 = vrot.slane %v1225, 4
    %v1233 = vadd.f32 %v140, %v1231
    %v1234 = vxor.u32 %v1233, 2147483648
    %v1235 = vmul.f32 %v1234, 1.442695
    %v1236 = vpow.pop %v1235
    %v1237 = vadd.f32 %v1236, 1.0
    %v1238 = vrcp.pop %v1237
    %v1239 = vmul.f32 1.0, %v1238
    %1240 = vrot.lane.b32.xlu0 %v1231, 96
    %v1241 = vpop.permute.xlu0 %1240
    %v1243 = vmul.f32 %v1239, %v1241
    %1245 = vrot.lane.b32.xlu0 %v1243, 32
    %v1246 = vpop.permute.xlu0 %1245
    %v1248 = vadd.f32 %v140, %v1246
    %v1249 = vtanh.pop %v1248
    %v1251 = vrot.slane %v1249, 2
    %v1253 = vsub.f32 %v1094, %v1251
    %v1255 = vrot.slane %v1253, 6
    %1256 = vrot.lane.b32.xlu0 %v1255, 112
    %v1257 = vpop.permute.xlu0 %1256
    %v1259 = vmul.f32 %v1239, %v1257
    %1261 = vrot.lane.b32.xlu0 %v1259, 16
    %v1262 = vpop.permute.xlu0 %1261
    %v1264 = vadd.f32 %v1249, %v1262
    %v1265 = vpack.c.bf16 %v1264, %v1264
    %v1267 = vrot.slane %v1265, 2
    %1268 = vrot.lane.b32.xlu0 %v1267, 96
    %v1269 = vpop.permute.xlu0 %1268
    %v1271 = vsel %vm258, %v1269, 0
    %1273 = vmatprep.subr.bf16.mxu0 0
    %1274 = vmatpush1.bf16.msra.mxu0 0
    %1275 = vmatprep.subr.bf16.mxu0 0
    %1276 = vmatpush1.bf16.msra.mxu0 0
    %1277 = vmatprep.subr.bf16.mxu0 0
    %1278 = vmatpush1.bf16.msra.mxu0 0
    %1279 = vmatprep.subr.bf16.mxu0 0
    %1280 = vmatpush1.bf16.msra.mxu0 0
    %1281 = vmatprep.subr.bf16.mxu0 0
    %1282 = vmatpush1.bf16.msra.mxu0 0
    %1283 = vmatprep.subr.bf16.mxu0 0
    %1284 = vmatpush1.bf16.msra.mxu0 0
    %1285 = vmatprep.subr.bf16.mxu0 0
    %1286 = vmatpush1.bf16.msra.mxu0 0
    %1287 = vmatprep.subr.bf16.mxu0 0
    %1288 = vmatpush1.bf16.msra.mxu0 %v256
    %1289 = vmatprep.subr.bf16.mxu0 0
    %1290 = vmatpush2.bf16.msra.mxu0 0
    %1291 = vmatprep.subr.bf16.mxu0 0
    %1292 = vmatpush2.bf16.msra.mxu0 0
    %1293 = vmatprep.subr.bf16.mxu0 0
    %1294 = vmatpush2.bf16.msra.mxu0 0
    %1295 = vmatprep.subr.bf16.mxu0 0
    %1296 = vmatpush2.bf16.msra.mxu0 0
    %1297 = vmatprep.subr.bf16.mxu0 0
    %1298 = vmatpush2.bf16.msra.mxu0 0
    %1299 = vmatprep.subr.bf16.mxu0 0
    %1300 = vmatpush2.bf16.msra.mxu0 0
    %1301 = vmatprep.subr.bf16.mxu0 0
    %1302 = vmatpush2.bf16.msra.mxu0 0
    %1303 = vmatprep.subr.bf16.mxu0 0
    %1304 = vmatpush2.bf16.msra.mxu0 0
    %1305 = vmatprep.mubr.bf16.mxu0 0
    %1306 = vmatmul.mubr.bf16.gmra.mxu0 %v1271
    %v1307 = vpop.f32.mrf.mxu0
    %v1308 = vadd.f32 %v161, %v1307
    %v1309 = vpop.f32.mrf.mxu0
    %v1310 = vpop.f32.mrf.mxu0
    %v1311 = vpop.f32.mrf.mxu0
    %1312 = vdwg.mxu0
    %1313 = vrot.lane.b32.xlu0 %v1225, 80
    %v1314 = vpop.permute.xlu0 %1313
    %v1316 = vadd.f32 %v1308, %v1314
    %v1317 = vxor.u32 %v1316, 2147483648
    %v1318 = vmul.f32 %v1317, 1.442695
    %v1319 = vpow.pop %v1318
    %v1320 = vadd.f32 %v1319, 1.0
    %v1321 = vrcp.pop %v1320
    %v1322 = vmul.f32 1.0, %v1321
    %1323 = vrot.lane.b32.xlu0 %v1225, 48
    %v1324 = vpop.permute.xlu0 %1323
    %v1326 = vmul.f32 %v1322, %v1324
    %1328 = vrot.lane.b32.xlu0 %v1326, 32
    %v1329 = vpop.permute.xlu0 %1328
    %v1331 = vadd.f32 %v1308, %v1329
    %v1332 = vtanh.pop %v1331
    %v1333 = vsub.f32 %v1173, %v1332
    %1335 = vrot.lane.b32.xlu0 %v1333, 112
    %v1336 = vpop.permute.xlu0 %1335
    %v1338 = vmul.f32 %v1322, %v1336
    %1340 = vrot.lane.b32.xlu0 %v1338, 16
    %v1341 = vpop.permute.xlu0 %1340
    %v1343 = vadd.f32 %v1332, %v1341
    %1345 = vrot.lane.b32.xlu0 %v1264, 96
    %v1346 = vpop.permute.xlu0 %1345
    %v1349 = vrot.slane %v1343, 4
    %1350 = vrot.lane.b32.xlu0 %v1349, 112
    %v1351 = vpop.permute.xlu0 %1350
    %v1353 = vsel %vm258, %v1346, %v1351
    %v1354 = vpack.c.bf16 %v1353, %v1353
    %v1356 = vrot.slane %v1354, 2
    %v1358 = vsel %vm98, %v1356, 0
    %1360 = vmatprep.subr.bf16.mxu0 0
    %1361 = vmatpush1.bf16.msra.mxu0 0
    %1362 = vmatprep.subr.bf16.mxu0 0
    %1363 = vmatpush1.bf16.msra.mxu0 0
    %1364 = vmatprep.subr.bf16.mxu0 0
    %1365 = vmatpush1.bf16.msra.mxu0 0
    %1366 = vmatprep.subr.bf16.mxu0 0
    %1367 = vmatpush1.bf16.msra.mxu0 0
    %1368 = vmatprep.subr.bf16.mxu0 0
    %1369 = vmatpush1.bf16.msra.mxu0 0
    %1370 = vmatprep.subr.bf16.mxu0 0
    %1371 = vmatpush1.bf16.msra.mxu0 0
    %1372 = vmatprep.subr.bf16.mxu0 0
    %1373 = vmatpush1.bf16.msra.mxu0 %v173
    %1374 = vmatprep.subr.bf16.mxu0 0
    %1375 = vmatpush1.bf16.msra.mxu0 %v172
    %1376 = vmatprep.subr.bf16.mxu0 0
    %1377 = vmatpush2.bf16.msra.mxu0 0
    %1378 = vmatprep.subr.bf16.mxu0 0
    %1379 = vmatpush2.bf16.msra.mxu0 0
    %1380 = vmatprep.subr.bf16.mxu0 0
    %1381 = vmatpush2.bf16.msra.mxu0 0
    %1382 = vmatprep.subr.bf16.mxu0 0
    %1383 = vmatpush2.bf16.msra.mxu0 0
    %1384 = vmatprep.subr.bf16.mxu0 0
    %1385 = vmatpush2.bf16.msra.mxu0 0
    %1386 = vmatprep.subr.bf16.mxu0 0
    %1387 = vmatpush2.bf16.msra.mxu0 0
    %1388 = vmatprep.subr.bf16.mxu0 0
    %1389 = vmatpush2.bf16.msra.mxu0 0
    %1390 = vmatprep.subr.bf16.mxu0 0
    %1391 = vmatpush2.bf16.msra.mxu0 0
    %1392 = vmatprep.mubr.bf16.mxu0 0
    %1393 = vmatmul.mubr.bf16.gmra.mxu0 %v1358
    %v1394 = vpop.f32.mrf.mxu0
    %v1395 = vadd.f32 %v154, %v1394
    %v1396 = vpop.f32.mrf.mxu0
    %v1397 = vpop.f32.mrf.mxu0
    %v1398 = vpop.f32.mrf.mxu0
    %1399 = vdwg.mxu0
    %v1401 = vrot.slane %v1395, 2
    %v1403 = vadd.f32 %v140, %v1401
    %v1404 = vxor.u32 %v1403, 2147483648
    %v1405 = vmul.f32 %v1404, 1.442695
    %v1406 = vpow.pop %v1405
    %v1407 = vadd.f32 %v1406, 1.0
    %v1408 = vrcp.pop %v1407
    %v1409 = vmul.f32 1.0, %v1408
    %1410 = vrot.lane.b32.xlu0 %v1401, 96
    %v1411 = vpop.permute.xlu0 %1410
    %v1413 = vmul.f32 %v1409, %v1411
    %1415 = vrot.lane.b32.xlu0 %v1413, 32
    %v1416 = vpop.permute.xlu0 %1415
    %v1418 = vadd.f32 %v140, %v1416
    %v1419 = vtanh.pop %v1418
    %v1421 = vrot.slane %v1419, 2
    %v1423 = vsub.f32 %v1264, %v1421
    %v1425 = vrot.slane %v1423, 6
    %1426 = vrot.lane.b32.xlu0 %v1425, 112
    %v1427 = vpop.permute.xlu0 %1426
    %v1429 = vmul.f32 %v1409, %v1427
    %1431 = vrot.lane.b32.xlu0 %v1429, 16
    %v1432 = vpop.permute.xlu0 %1431
    %v1434 = vadd.f32 %v1419, %v1432
    %v1435 = vpack.c.bf16 %v1434, %v1434
    %v1437 = vrot.slane %v1435, 3
    %1438 = vrot.lane.b32.xlu0 %v1437, 96
    %v1439 = vpop.permute.xlu0 %1438
    %v1441 = vsel %vm258, %v1439, 0
    %1443 = vmatprep.subr.bf16.mxu0 0
    %1444 = vmatpush1.bf16.msra.mxu0 0
    %1445 = vmatprep.subr.bf16.mxu0 0
    %1446 = vmatpush1.bf16.msra.mxu0 0
    %1447 = vmatprep.subr.bf16.mxu0 0
    %1448 = vmatpush1.bf16.msra.mxu0 0
    %1449 = vmatprep.subr.bf16.mxu0 0
    %1450 = vmatpush1.bf16.msra.mxu0 0
    %1451 = vmatprep.subr.bf16.mxu0 0
    %1452 = vmatpush1.bf16.msra.mxu0 0
    %1453 = vmatprep.subr.bf16.mxu0 0
    %1454 = vmatpush1.bf16.msra.mxu0 0
    %1455 = vmatprep.subr.bf16.mxu0 0
    %1456 = vmatpush1.bf16.msra.mxu0 0
    %1457 = vmatprep.subr.bf16.mxu0 0
    %1458 = vmatpush1.bf16.msra.mxu0 %v256
    %1459 = vmatprep.subr.bf16.mxu0 0
    %1460 = vmatpush2.bf16.msra.mxu0 0
    %1461 = vmatprep.subr.bf16.mxu0 0
    %1462 = vmatpush2.bf16.msra.mxu0 0
    %1463 = vmatprep.subr.bf16.mxu0 0
    %1464 = vmatpush2.bf16.msra.mxu0 0
    %1465 = vmatprep.subr.bf16.mxu0 0
    %1466 = vmatpush2.bf16.msra.mxu0 0
    %1467 = vmatprep.subr.bf16.mxu0 0
    %1468 = vmatpush2.bf16.msra.mxu0 0
    %1469 = vmatprep.subr.bf16.mxu0 0
    %1470 = vmatpush2.bf16.msra.mxu0 0
    %1471 = vmatprep.subr.bf16.mxu0 0
    %1472 = vmatpush2.bf16.msra.mxu0 0
    %1473 = vmatprep.subr.bf16.mxu0 0
    %1474 = vmatpush2.bf16.msra.mxu0 0
    %1475 = vmatprep.mubr.bf16.mxu0 0
    %1476 = vmatmul.mubr.bf16.gmra.mxu0 %v1441
    %v1477 = vpop.f32.mrf.mxu0
    %v1478 = vadd.f32 %v161, %v1477
    %v1479 = vpop.f32.mrf.mxu0
    %v1480 = vpop.f32.mrf.mxu0
    %v1481 = vpop.f32.mrf.mxu0
    %1482 = vdwg.mxu0
    %1483 = vrot.lane.b32.xlu0 %v1395, 80
    %v1484 = vpop.permute.xlu0 %1483
    %v1486 = vadd.f32 %v1478, %v1484
    %v1487 = vxor.u32 %v1486, 2147483648
    %v1488 = vmul.f32 %v1487, 1.442695
    %v1489 = vpow.pop %v1488
    %v1490 = vadd.f32 %v1489, 1.0
    %v1491 = vrcp.pop %v1490
    %v1492 = vmul.f32 1.0, %v1491
    %1493 = vrot.lane.b32.xlu0 %v1395, 48
    %v1494 = vpop.permute.xlu0 %1493
    %v1496 = vmul.f32 %v1492, %v1494
    %1498 = vrot.lane.b32.xlu0 %v1496, 32
    %v1499 = vpop.permute.xlu0 %1498
    %v1501 = vadd.f32 %v1478, %v1499
    %v1502 = vtanh.pop %v1501
    %v1503 = vsub.f32 %v1343, %v1502
    %1505 = vrot.lane.b32.xlu0 %v1503, 112
    %v1506 = vpop.permute.xlu0 %1505
    %v1508 = vmul.f32 %v1492, %v1506
    %1510 = vrot.lane.b32.xlu0 %v1508, 16
    %v1511 = vpop.permute.xlu0 %1510
    %v1513 = vadd.f32 %v1502, %v1511
    %v1520 = vrot.slane %v1513, 2
    %vm1522 = vcmask 1041408
    %v1523 = vsel %vm1522, %v332, %v505
    %vm1524 = vcmask 1043456
    %v1525 = vsel %vm1524, %v1523, %v675
    %vm1526 = vcmask 1045504
    %v1527 = vsel %vm1526, %v1525, %v845
    %v1528 = vsel %vm1522, %v1006, %v1179
    %v1529 = vsel %vm1524, %v1528, %v1349
    %v1530 = vsel %vm1526, %v1529, %v1520
    %v1531 = vpack.c.bf16 %v1530, %v1527
    %v1532 = vld [vmem:[%s7] sm:$0xf]
    %v1533 = vld [vmem:[%s7 + $0x4] sm:$0xf]
    %v1534 = vld [vmem:[#allocation6] sm:$0x1]
    %v1536 = vlaneseq
    %v1537 = vshrl.u32 %v1536, 7
    %v1538 = vsub.s32 0, %v1537
    %v1539 = vrot.slane %v1534, %v1538
    %1542 = vrot.lane.b32.xlu0 %v1531, 96
    %v1543 = vpop.permute.xlu0 %1542
    %v1546 = vunpack.c.l.b16 %v1532
    %v1547 = vunpack.c.l.b16 %v1533
    %v1548 = vpack.c.b16 %v1547, %v1546
    %v1551 = vsel %vm258, %v1543, 0
    %1553 = vmatprep.subr.bf16.mxu0 0
    %1554 = vmatpush1.bf16.msra.mxu0 0
    %1555 = vmatprep.subr.bf16.mxu0 0
    %1556 = vmatpush1.bf16.msra.mxu0 0
    %1557 = vmatprep.subr.bf16.mxu0 0
    %1558 = vmatpush1.bf16.msra.mxu0 0
    %1559 = vmatprep.subr.bf16.mxu0 0
    %1560 = vmatpush1.bf16.msra.mxu0 0
    %1561 = vmatprep.subr.bf16.mxu0 0
    %1562 = vmatpush1.bf16.msra.mxu0 0
    %1563 = vmatprep.subr.bf16.mxu0 0
    %1564 = vmatpush1.bf16.msra.mxu0 0
    %1565 = vmatprep.subr.bf16.mxu0 0
    %1566 = vmatpush1.bf16.msra.mxu0 0
    %1567 = vmatprep.subr.bf16.mxu0 0
    %1568 = vmatpush1.bf16.msra.mxu0 %v1548
    %1569 = vmatprep.subr.bf16.mxu0 0
    %1570 = vmatpush2.bf16.msra.mxu0 0
    %1571 = vmatprep.subr.bf16.mxu0 0
    %1572 = vmatpush2.bf16.msra.mxu0 0
    %1573 = vmatprep.subr.bf16.mxu0 0
    %1574 = vmatpush2.bf16.msra.mxu0 0
    %1575 = vmatprep.subr.bf16.mxu0 0
    %1576 = vmatpush2.bf16.msra.mxu0 0
    %1577 = vmatprep.subr.bf16.mxu0 0
    %1578 = vmatpush2.bf16.msra.mxu0 0
    %1579 = vmatprep.subr.bf16.mxu0 0
    %1580 = vmatpush2.bf16.msra.mxu0 0
    %1581 = vmatprep.subr.bf16.mxu0 0
    %1582 = vmatpush2.bf16.msra.mxu0 0
    %1583 = vmatprep.subr.bf16.mxu0 0
    %1584 = vmatpush2.bf16.msra.mxu0 0
    %1585 = vmatprep.mubr.bf16.mxu0 0
    %1586 = vmatmul.mubr.bf16.gmra.mxu0 %v1551
    %v1587 = vpop.f32.mrf.mxu0
    %v1588 = vadd.f32 %v1539, %v1587
    %v1589 = vpop.f32.mrf.mxu0
    %v1590 = vpop.f32.mrf.mxu0
    %v1591 = vadd.f32 %v1539, %v1590
    %v1592 = vpop.f32.mrf.mxu0
    %1593 = vdwg.mxu0
    %v1594 = vxor.u32 %v1588, 2147483648
    %v1595 = vxor.u32 %v1591, 2147483648
    %v1596 = vmul.f32 %v1594, 1.442695
    %v1597 = vpow.pop %v1596
    %v1598 = vmul.f32 %v1595, 1.442695
    %v1599 = vpow.pop %v1598
    %v1600 = vadd.f32 %v1597, 1.0
    %v1601 = vadd.f32 %v1599, 1.0
    %v1602 = vrcp.pop %v1600
    %v1603 = vmul.f32 1.0, %v1602
    %v1604 = vrcp.pop %v1601
    %v1605 = vmul.f32 1.0, %v1604
    %1606 = vst.msk [vmem:[%s9] sm:$0xff] %vm258, %v1603
    %1607 = vst.msk [vmem:[%s9 + $0x8] sm:$0xff] %vm258, %v1605
    // Predicated region
    $region50: #{recovery_forward.1} parent=1 // pred_check
      _
    $region51: #{recovery_forward.1} parent=1 // pred_check_branch
      %1609 = sbr.rel (0) target = $region53
    $region52: #{recovery_forward.1} parent=1 // pred_region
      _
    $region53: #{recovery_forward.1} parent=1 // pred_fallthru
      _
    // Predicated region
    $region54: #{recovery_forward.1} parent=1 // pred_check
      _
    $region55: #{recovery_forward.1} parent=1 // pred_check_branch
      %1611 = sbr.rel (0) target = $region57
    $region56: #{recovery_forward.1} parent=1 // pred_region
      _
    $region57: #{recovery_forward.1} parent=1 // pred_fallthru
      _
    %1612 = vsyncpa [#allocation3], 1
    %1613 = vsyncpa [#allocation5], 1

</llo_original>
